<compile_context>
chip_gen: v6e
topology: v6e:2x2x1
jax: 0.10.0
libtpu: 0.0.40
codegen_flags: <defaults>
</compile_context>

<pallas_src>
import jax
import jax.numpy as jnp
from jax.experimental import pallas as pl
from jax.experimental.pallas import tpu as pltpu


LANE = 128


def _round_up(x, m):
    return (x + m - 1) // m * m


# ----------------------------------------------------------------------------
# Pallas kernel: full forward pass for one batch tile of TB examples.
# ----------------------------------------------------------------------------
def _tgif_qa_kernel(vf_ref, vm_ref, qa_ref, qm_ref,
                    wv_ref, bv_ref, wt_ref, bt_ref,
                    wpv_ref, wpt_ref, bp_ref, wta_ref, bta_ref,
                    wc_ref, bc_ref, out_ref):
    TB, T, Dvp = vf_ref.shape
    _, L, Dtp = qa_ref.shape
    Hp = wv_ref.shape[1]

    vf = vf_ref[...]          # (TB, T, Dvp) bf16
    qa = qa_ref[...]          # (TB, L, Dtp) bf16
    vm = vm_ref[...]          # (TB, T) f32, already mask/count
    qm = qm_ref[...]          # (TB, L) f32, already mask/count

    # ---- video_encoder: per-step tanh(Linear), masked mean over time --------
    v_states = jnp.tanh(
        jnp.dot(vf.reshape(TB * T, Dvp), wv_ref[...],
                preferred_element_type=jnp.float32) + bv_ref[...]
    ).reshape(TB, T, Hp)                                  # last_layer_output, f32

    # ---- text_encoder --------------------------------------------------------
    t_states = jnp.tanh(
        jnp.dot(qa.reshape(TB * L, Dtp), wt_ref[...],
                preferred_element_type=jnp.float32) + bt_ref[...]
    ).reshape(TB, L, Hp)

    v_pooled = jnp.sum(v_states * vm[:, :, None], axis=1)  # (TB, Hp)
    t_pooled = jnp.sum(t_states * qm[:, :, None], axis=1)  # (TB, Hp)

    # ---- _ParallelModalities.parallel_feedforward: Linear(2H -> H), identity.
    # torch.cat((v, t), 1) @ Wp == v @ Wp[:H] + t @ Wp[H:]
    enc = (jnp.dot(v_pooled, wpv_ref[...], preferred_element_type=jnp.float32)
           + jnp.dot(t_pooled, wpt_ref[...], preferred_element_type=jnp.float32)
           + bp_ref[...])                                   # (TB, Hp)

    # ---- temporal attention over video_encoder.last_layer_output ------------
    # (module passes no mask to temporal_attention, so no masking here)
    scores = jnp.sum(v_states * enc[:, None, :], axis=-1)   # (TB, T)
    scores = scores - jnp.max(scores, axis=-1, keepdims=True)
    e = jnp.exp(scores)
    inv_denom = pl.reciprocal(jnp.sum(e, axis=-1, keepdims=True), approx=True)
    alpha = e * inv_denom                                    # (TB, T)
    attended = jnp.sum(v_states * alpha[:, :, None], axis=1)  # (TB, Hp)

    enc = enc + jnp.tanh(
        jnp.dot(attended, wta_ref[...],
                preferred_element_type=jnp.float32) + bta_ref[...])

    # ---- classifier_feedforward: Linear(H -> 1) via VPU mul + lane reduce ----
    score = jnp.sum(enc * wc_ref[...], axis=-1, keepdims=True) + bc_ref[...]  # (TB, 1)
    out_ref[...] = jnp.broadcast_to(score, (TB, out_ref.shape[-1]))


# ----------------------------------------------------------------------------
# Wrapper: padding to lane width, bf16 MXU inputs, batch-tiled grid.
# ----------------------------------------------------------------------------
def tgif_qa_answer_scorer(video_features, video_features_mask,
                          embedded_qa, qa_mask, params, *, batch_block=8):
    """Returns the per-example answer score, shape (B,)."""
    B, T, Dv = video_features.shape
    _, L, Dt = embedded_qa.shape
    H = params["wv"].shape[1]

    f32, bf16 = jnp.float32, jnp.bfloat16
    Dvp = _round_up(Dv, LANE)
    Dtp = _round_up(Dt, LANE)
    Hp = _round_up(H, LANE)
    TB = batch_block
    Bp = _round_up(B, TB)
    OUT_LANES = LANE

    def pad(x, shape):
        return jnp.pad(x, [(0, s - d) for s, d in zip(shape, x.shape)])

    # Lane-dense masks with 1/count folded in (masked mean == sum(states * m)).
    vm = video_features_mask.astype(f32)
    qm = qa_mask.astype(f32)
    vm = vm / jnp.maximum(jnp.sum(vm, axis=1, keepdims=True), 1.0)
    qm = qm / jnp.maximum(jnp.sum(qm, axis=1, keepdims=True), 1.0)

    vf = pad(video_features.astype(bf16), (Bp, T, Dvp))
    qa = pad(embedded_qa.astype(bf16), (Bp, L, Dtp))
    vm = pad(vm, (Bp, T))
    qm = pad(qm, (Bp, L))

    wv = pad(params["wv"].astype(bf16), (Dvp, Hp))
    wt = pad(params["wt"].astype(bf16), (Dtp, Hp))
    bv = pad(params["bv"].astype(f32), (1, Hp))
    bt = pad(params["bt"].astype(f32), (1, Hp))
    wp = params["wp"].astype(f32)
    wpv = pad(wp[:H, :], (Hp, Hp))
    wpt = pad(wp[H:, :], (Hp, Hp))
    bp = pad(params["bp"].astype(f32), (1, Hp))
    wta = pad(params["wta"].astype(f32), (Hp, Hp))
    bta = pad(params["bta"].astype(f32), (1, Hp))
    wc = pad(params["wc"].astype(f32).T, (1, Hp))     # (1, Hp) row vector
    bc = params["bc"].astype(f32).reshape(1, 1)

    args = (vf, vm, qa, qm, wv, bv, wt, bt, wpv, wpt, bp, wta, bta, wc, bc)

    in_specs = [
        pl.BlockSpec((TB, T, Dvp), lambda i: (i, 0, 0)),   # vf  (batch-tiled)
        pl.BlockSpec((TB, T), lambda i: (i, 0)),           # vm
        pl.BlockSpec((TB, L, Dtp), lambda i: (i, 0, 0)),   # qa
        pl.BlockSpec((TB, L), lambda i: (i, 0)),           # qm
        pl.BlockSpec((Dvp, Hp), lambda i: (0, 0)),         # wv  (VMEM-resident)
        pl.BlockSpec((1, Hp), lambda i: (0, 0)),           # bv
        pl.BlockSpec((Dtp, Hp), lambda i: (0, 0)),         # wt
        pl.BlockSpec((1, Hp), lambda i: (0, 0)),           # bt
        pl.BlockSpec((Hp, Hp), lambda i: (0, 0)),          # wpv
        pl.BlockSpec((Hp, Hp), lambda i: (0, 0)),          # wpt
        pl.BlockSpec((1, Hp), lambda i: (0, 0)),           # bp
        pl.BlockSpec((Hp, Hp), lambda i: (0, 0)),          # wta
        pl.BlockSpec((1, Hp), lambda i: (0, 0)),           # bta
        pl.BlockSpec((1, Hp), lambda i: (0, 0)),           # wc
        pl.BlockSpec((1, 1), lambda i: (0, 0)),            # bc
    ]

    out = pl.pallas_call(
        _tgif_qa_kernel,
        out_shape=jax.ShapeDtypeStruct((Bp, OUT_LANES), jnp.float32),
        grid=(Bp // TB,),
        in_specs=in_specs,
        out_specs=pl.BlockSpec((TB, OUT_LANES), lambda i: (i, 0)),
        compiler_params=pltpu.CompilerParams(
            dimension_semantics=("parallel",)),
    )(*args)
    return out[:B, 0]   # .squeeze(1)


# ----------------------------------------------------------------------------
# Plain-JAX reference (same math & precision choices) for a correctness check.
# ----------------------------------------------------------------------------
def _reference(vf, vmask, qa, qmask, p):
    f32, bf16 = jnp.float32, jnp.bfloat16
    H = p["wv"].shape[1]
    vm = vmask.astype(f32)
    qm = qmask.astype(f32)
    vmn = vm / jnp.maximum(jnp.sum(vm, axis=1, keepdims=True), 1.0)
    qmn = qm / jnp.maximum(jnp.sum(qm, axis=1, keepdims=True), 1.0)
    v_states = jnp.tanh(
        jnp.einsum("btd,dh->bth", vf.astype(bf16), p["wv"].astype(bf16),
                   preferred_element_type=f32) + p["bv"])
    t_states = jnp.tanh(
        jnp.einsum("bld,dh->blh", qa.astype(bf16), p["wt"].astype(bf16),
                   preferred_element_type=f32) + p["bt"])
    v_pooled = jnp.einsum("bth,bt->bh", v_states, vmn)
    t_pooled = jnp.einsum("blh,bl->bh", t_states, qmn)
    cat = jnp.concatenate([v_pooled, t_pooled], axis=1)
    enc = cat @ p["wp"] + p["bp"]
    scores = jnp.einsum("bth,bh->bt", v_states, enc)
    alpha = jax.nn.softmax(scores, axis=-1)
    attended = jnp.einsum("bt,bth->bh", alpha, v_states)
    enc = enc + jnp.tanh(attended @ p["wta"] + p["bta"])
    return (enc @ p["wc"] + p["bc"])[:, 0]


if __name__ == "__main__":
    B, T, L, Dv, Dt, H = 16, 8, 8, 32, 32, 32

    key = jax.random.PRNGKey(0)
    ks = jax.random.split(key, 10)

    video_features = jax.random.normal(ks[0], (B, T, Dv), jnp.float32)
    embedded_qa = jax.random.normal(ks[1], (B, L, Dt), jnp.float32)
    v_lens = 3 + (jnp.arange(B) % (T - 2))
    q_lens = 2 + (jnp.arange(B) % (L - 1))
    video_mask = (jnp.arange(T)[None, :] < v_lens[:, None]).astype(jnp.float32)
    qa_mask = (jnp.arange(L)[None, :] < q_lens[:, None]).astype(jnp.float32)

    params = {
        "wv": 0.1 * jax.random.normal(ks[2], (Dv, H), jnp.float32),
        "bv": jnp.zeros((1, H), jnp.float32),
        "wt": 0.1 * jax.random.normal(ks[3], (Dt, H), jnp.float32),
        "bt": jnp.zeros((1, H), jnp.float32),
        "wp": 0.1 * jax.random.normal(ks[4], (2 * H, H), jnp.float32),
        "bp": 0.01 * jax.random.normal(ks[5], (1, H), jnp.float32),
        "wta": 0.1 * jax.random.normal(ks[6], (H, H), jnp.float32),
        "bta": jnp.zeros((1, H), jnp.float32),
        "wc": 0.1 * jax.random.normal(ks[7], (H, 1), jnp.float32),
        "bc": 0.01 * jax.random.normal(ks[8], (1, 1), jnp.float32),
    }

    out = tgif_qa_answer_scorer(video_features, video_mask,
                                embedded_qa, qa_mask, params)
    out = jax.block_until_ready(out)

    ref = _reference(video_features, video_mask, embedded_qa, qa_mask, params)
    assert out.shape == (B,)
    assert jnp.allclose(out, ref, atol=1e-2, rtol=1e-2), (out, ref)

    # TODO(synk): spatial_attention branch (5-D conv-feature video + attention
    # over H*W positions) and the 'video-text'/'text-video'/'text' encoder
    # chains are not instantiated in this configuration.
    print("KERNEL_OK")
</pallas_src>

<mosaic_0001>
module attributes {stable_mosaic.version = 11 : i64} {
  func.func @_tgif_qa_kernel(%arg0: i32, %arg1: memref<8x8x128xbf16, #tpu.memory_space<vmem>>, %arg2: memref<8x8xf32, #tpu.memory_space<vmem>>, %arg3: memref<8x8x128xbf16, #tpu.memory_space<vmem>>, %arg4: memref<8x8xf32, #tpu.memory_space<vmem>>, %arg5: memref<128x128xbf16, #tpu.memory_space<vmem>>, %arg6: memref<1x128xf32, #tpu.memory_space<vmem>>, %arg7: memref<128x128xbf16, #tpu.memory_space<vmem>>, %arg8: memref<1x128xf32, #tpu.memory_space<vmem>>, %arg9: memref<128x128xf32, #tpu.memory_space<vmem>>, %arg10: memref<128x128xf32, #tpu.memory_space<vmem>>, %arg11: memref<1x128xf32, #tpu.memory_space<vmem>>, %arg12: memref<128x128xf32, #tpu.memory_space<vmem>>, %arg13: memref<1x128xf32, #tpu.memory_space<vmem>>, %arg14: memref<1x128xf32, #tpu.memory_space<vmem>>, %arg15: memref<1x1xf32, #tpu.memory_space<vmem>>, %arg16: memref<8x128xf32, #tpu.memory_space<vmem>>) attributes {dimension_semantics = [#tpu.dimension_semantics<parallel>], iteration_bounds = array<i64: 2>, scalar_prefetch = 0 : i64, scratch_operands = 0 : i64, tpu.core_type = #tpu.core_type<tc>, window_params = [{transform_indices = @transform_0, window_bounds = array<i64: 8, 8, 128>}, {transform_indices = @transform_1, window_bounds = array<i64: 8, 8>}, {transform_indices = @transform_2, window_bounds = array<i64: 8, 8, 128>}, {transform_indices = @transform_3, window_bounds = array<i64: 8, 8>}, {pipeline_mode = #tpu.pipeline_mode<synchronous>, transform_indices = @transform_4, window_bounds = array<i64: 128, 128>}, {pipeline_mode = #tpu.pipeline_mode<synchronous>, transform_indices = @transform_5, window_bounds = array<i64: 1, 128>}, {pipeline_mode = #tpu.pipeline_mode<synchronous>, transform_indices = @transform_6, window_bounds = array<i64: 128, 128>}, {pipeline_mode = #tpu.pipeline_mode<synchronous>, transform_indices = @transform_7, window_bounds = array<i64: 1, 128>}, {pipeline_mode = #tpu.pipeline_mode<synchronous>, transform_indices = @transform_8, window_bounds = array<i64: 128, 128>}, {pipeline_mode = #tpu.pipeline_mode<synchronous>, transform_indices = @transform_9, window_bounds = array<i64: 128, 128>}, {pipeline_mode = #tpu.pipeline_mode<synchronous>, transform_indices = @transform_10, window_bounds = array<i64: 1, 128>}, {pipeline_mode = #tpu.pipeline_mode<synchronous>, transform_indices = @transform_11, window_bounds = array<i64: 128, 128>}, {pipeline_mode = #tpu.pipeline_mode<synchronous>, transform_indices = @transform_12, window_bounds = array<i64: 1, 128>}, {pipeline_mode = #tpu.pipeline_mode<synchronous>, transform_indices = @transform_13, window_bounds = array<i64: 1, 128>}, {pipeline_mode = #tpu.pipeline_mode<synchronous>, transform_indices = @transform_14, window_bounds = array<i64: 1, 1>}, {transform_indices = @transform_15, window_bounds = array<i64: 8, 128>}]} {
    %c0 = arith.constant 0 : index
    %c0_0 = arith.constant 0 : index
    %c0_1 = arith.constant 0 : index
    %0 = vector.load %arg1[%c0, %c0_0, %c0_1] : memref<8x8x128xbf16, #tpu.memory_space<vmem>>, vector<8x8x128xbf16>
    %c0_2 = arith.constant 0 : index
    %c0_3 = arith.constant 0 : index
    %c0_4 = arith.constant 0 : index
    %1 = vector.load %arg3[%c0_2, %c0_3, %c0_4] : memref<8x8x128xbf16, #tpu.memory_space<vmem>>, vector<8x8x128xbf16>
    %c0_5 = arith.constant 0 : index
    %c0_6 = arith.constant 0 : index
    %2 = vector.load %arg2[%c0_5, %c0_6] : memref<8x8xf32, #tpu.memory_space<vmem>>, vector<8x8xf32>
    %c0_7 = arith.constant 0 : index
    %c0_8 = arith.constant 0 : index
    %3 = vector.load %arg4[%c0_7, %c0_8] : memref<8x8xf32, #tpu.memory_space<vmem>>, vector<8x8xf32>
    %4 = vector.shape_cast %0 : vector<8x8x128xbf16> to vector<64x128xbf16>
    %c0_9 = arith.constant 0 : index
    %c0_10 = arith.constant 0 : index
    %5 = vector.load %arg5[%c0_9, %c0_10] : memref<128x128xbf16, #tpu.memory_space<vmem>>, vector<128x128xbf16>
    %cst = arith.constant dense<0.000000e+00> : vector<64x128xf32>
    %6 = tpu.matmul %4, %5, %cst {dimension_numbers = #tpu.dot_dimension_numbers<[1], [0], [0], [1], [0, 0, 1, 1], [], []>} : vector<64x128xbf16>, vector<128x128xbf16>, vector<64x128xf32> -> vector<64x128xf32>
    %c0_11 = arith.constant 0 : index
    %c0_12 = arith.constant 0 : index
    %7 = vector.load %arg6[%c0_11, %c0_12] : memref<1x128xf32, #tpu.memory_space<vmem>>, vector<1x128xf32>
    %8 = vector.broadcast %7 : vector<1x128xf32> to vector<64x128xf32>
    %9 = arith.addf %6, %8 : vector<64x128xf32>
    %10 = math.tanh %9 : vector<64x128xf32>
    %11 = vector.shape_cast %10 : vector<64x128xf32> to vector<8x8x128xf32>
    %12 = vector.shape_cast %1 : vector<8x8x128xbf16> to vector<64x128xbf16>
    %c0_13 = arith.constant 0 : index
    %c0_14 = arith.constant 0 : index
    %13 = vector.load %arg7[%c0_13, %c0_14] : memref<128x128xbf16, #tpu.memory_space<vmem>>, vector<128x128xbf16>
    %cst_15 = arith.constant dense<0.000000e+00> : vector<64x128xf32>
    %14 = tpu.matmul %12, %13, %cst_15 {dimension_numbers = #tpu.dot_dimension_numbers<[1], [0], [0], [1], [0, 0, 1, 1], [], []>} : vector<64x128xbf16>, vector<128x128xbf16>, vector<64x128xf32> -> vector<64x128xf32>
    %c0_16 = arith.constant 0 : index
    %c0_17 = arith.constant 0 : index
    %15 = vector.load %arg8[%c0_16, %c0_17] : memref<1x128xf32, #tpu.memory_space<vmem>>, vector<1x128xf32>
    %16 = vector.broadcast %15 : vector<1x128xf32> to vector<64x128xf32>
    %17 = arith.addf %14, %16 : vector<64x128xf32>
    %18 = math.tanh %17 : vector<64x128xf32>
    %19 = vector.shape_cast %18 : vector<64x128xf32> to vector<8x8x128xf32>
    %20 = vector.shape_cast %2 : vector<8x8xf32> to vector<8x8x1xf32>
    %21 = vector.broadcast %20 : vector<8x8x1xf32> to vector<8x8x128xf32>
    %22 = arith.mulf %11, %21 : vector<8x8x128xf32>
    %cst_18 = arith.constant dense<0.000000e+00> : vector<8x128xf32>
    %23 = vector.multi_reduction <add>, %22, %cst_18 [1] : vector<8x8x128xf32> to vector<8x128xf32>
    %24 = vector.shape_cast %3 : vector<8x8xf32> to vector<8x8x1xf32>
    %25 = vector.broadcast %24 : vector<8x8x1xf32> to vector<8x8x128xf32>
    %26 = arith.mulf %19, %25 : vector<8x8x128xf32>
    %cst_19 = arith.constant dense<0.000000e+00> : vector<8x128xf32>
    %27 = vector.multi_reduction <add>, %26, %cst_19 [1] : vector<8x8x128xf32> to vector<8x128xf32>
    %c0_20 = arith.constant 0 : index
    %c0_21 = arith.constant 0 : index
    %28 = vector.load %arg9[%c0_20, %c0_21] : memref<128x128xf32, #tpu.memory_space<vmem>>, vector<128x128xf32>
    %cst_22 = arith.constant dense<0.000000e+00> : vector<8x128xf32>
    %29 = tpu.matmul %23, %28, %cst_22 {dimension_numbers = #tpu.dot_dimension_numbers<[1], [0], [0], [1], [0, 0, 1, 1], [], []>} : vector<8x128xf32>, vector<128x128xf32>, vector<8x128xf32> -> vector<8x128xf32>
    %c0_23 = arith.constant 0 : index
    %c0_24 = arith.constant 0 : index
    %30 = vector.load %arg10[%c0_23, %c0_24] : memref<128x128xf32, #tpu.memory_space<vmem>>, vector<128x128xf32>
    %cst_25 = arith.constant dense<0.000000e+00> : vector<8x128xf32>
    %31 = tpu.matmul %27, %30, %cst_25 {dimension_numbers = #tpu.dot_dimension_numbers<[1], [0], [0], [1], [0, 0, 1, 1], [], []>} : vector<8x128xf32>, vector<128x128xf32>, vector<8x128xf32> -> vector<8x128xf32>
    %32 = arith.addf %29, %31 : vector<8x128xf32>
    %c0_26 = arith.constant 0 : index
    %c0_27 = arith.constant 0 : index
    %33 = vector.load %arg11[%c0_26, %c0_27] : memref<1x128xf32, #tpu.memory_space<vmem>>, vector<1x128xf32>
    %34 = vector.broadcast %33 : vector<1x128xf32> to vector<8x128xf32>
    %35 = arith.addf %32, %34 : vector<8x128xf32>
    %36 = vector.shape_cast %35 : vector<8x128xf32> to vector<8x1x128xf32>
    %37 = vector.broadcast %36 : vector<8x1x128xf32> to vector<8x8x128xf32>
    %38 = arith.mulf %11, %37 : vector<8x8x128xf32>
    %cst_28 = arith.constant dense<0.000000e+00> : vector<8x8xf32>
    %39 = vector.multi_reduction <add>, %38, %cst_28 [2] : vector<8x8x128xf32> to vector<8x8xf32>
    %cst_29 = arith.constant dense<0xFF800000> : vector<8xf32>
    %40 = vector.multi_reduction <maximumf>, %39, %cst_29 [1] : vector<8x8xf32> to vector<8xf32>
    %41 = vector.shape_cast %40 : vector<8xf32> to vector<8x1xf32>
    %42 = vector.broadcast %41 : vector<8x1xf32> to vector<8x8xf32>
    %43 = arith.subf %39, %42 : vector<8x8xf32>
    %44 = math.exp %43 : vector<8x8xf32>
    %cst_30 = arith.constant dense<0.000000e+00> : vector<8xf32>
    %45 = vector.multi_reduction <add>, %44, %cst_30 [1] : vector<8x8xf32> to vector<8xf32>
    %46 = vector.shape_cast %45 : vector<8xf32> to vector<8x1xf32>
    %47 = tpu.reciprocal %46 {approx = true} : vector<8x1xf32> -> vector<8x1xf32>
    %48 = vector.broadcast %47 : vector<8x1xf32> to vector<8x8xf32>
    %49 = arith.mulf %44, %48 : vector<8x8xf32>
    %50 = vector.shape_cast %49 : vector<8x8xf32> to vector<8x8x1xf32>
    %51 = vector.broadcast %50 : vector<8x8x1xf32> to vector<8x8x128xf32>
    %52 = arith.mulf %11, %51 : vector<8x8x128xf32>
    %cst_31 = arith.constant dense<0.000000e+00> : vector<8x128xf32>
    %53 = vector.multi_reduction <add>, %52, %cst_31 [1] : vector<8x8x128xf32> to vector<8x128xf32>
    %c0_32 = arith.constant 0 : index
    %c0_33 = arith.constant 0 : index
    %54 = vector.load %arg12[%c0_32, %c0_33] : memref<128x128xf32, #tpu.memory_space<vmem>>, vector<128x128xf32>
    %cst_34 = arith.constant dense<0.000000e+00> : vector<8x128xf32>
    %55 = tpu.matmul %53, %54, %cst_34 {dimension_numbers = #tpu.dot_dimension_numbers<[1], [0], [0], [1], [0, 0, 1, 1], [], []>} : vector<8x128xf32>, vector<128x128xf32>, vector<8x128xf32> -> vector<8x128xf32>
    %c0_35 = arith.constant 0 : index
    %c0_36 = arith.constant 0 : index
    %56 = vector.load %arg13[%c0_35, %c0_36] : memref<1x128xf32, #tpu.memory_space<vmem>>, vector<1x128xf32>
    %57 = vector.broadcast %56 : vector<1x128xf32> to vector<8x128xf32>
    %58 = arith.addf %55, %57 : vector<8x128xf32>
    %59 = math.tanh %58 : vector<8x128xf32>
    %60 = arith.addf %35, %59 : vector<8x128xf32>
    %c0_37 = arith.constant 0 : index
    %c0_38 = arith.constant 0 : index
    %61 = vector.load %arg14[%c0_37, %c0_38] : memref<1x128xf32, #tpu.memory_space<vmem>>, vector<1x128xf32>
    %62 = vector.broadcast %61 : vector<1x128xf32> to vector<8x128xf32>
    %63 = arith.mulf %60, %62 : vector<8x128xf32>
    %cst_39 = arith.constant dense<0.000000e+00> : vector<8xf32>
    %64 = vector.multi_reduction <add>, %63, %cst_39 [1] : vector<8x128xf32> to vector<8xf32>
    %65 = vector.shape_cast %64 : vector<8xf32> to vector<8x1xf32>
    %c0_40 = arith.constant 0 : index
    %c0_41 = arith.constant 0 : index
    %66 = vector.load %arg15[%c0_40, %c0_41] : memref<1x1xf32, #tpu.memory_space<vmem>>, vector<1x1xf32>
    %67 = vector.broadcast %66 : vector<1x1xf32> to vector<8x1xf32>
    %68 = arith.addf %65, %67 : vector<8x1xf32>
    %69 = vector.shape_cast %68 : vector<8x1xf32> to vector<8x1xf32>
    %70 = vector.broadcast %69 : vector<8x1xf32> to vector<8x128xf32>
    %c0_42 = arith.constant 0 : index
    %c0_43 = arith.constant 0 : index
    %71 = vector.load %arg16[%c0_42, %c0_43] : memref<8x128xf32, #tpu.memory_space<vmem>>, vector<8x128xf32>
    tpu.vector_store %arg16[%c0_42, %c0_43], %70 {strides = array<i32>} : memref<8x128xf32, #tpu.memory_space<vmem>>, vector<8x128xf32>,
    return
  }
  func.func @transform_0(%arg0: i32) -> (i32, i32, i32) {
    %c0_i32 = arith.constant 0 : i32
    %c0_i32_0 = arith.constant 0 : i32
    %c0_i32_1 = arith.constant 0 : i32
    return %arg0, %c0_i32, %c0_i32_0 : i32, i32, i32
  }
  func.func @transform_1(%arg0: i32) -> (i32, i32) {
    %c0_i32 = arith.constant 0 : i32
    %c0_i32_0 = arith.constant 0 : i32
    return %arg0, %c0_i32 : i32, i32
  }
  func.func @transform_2(%arg0: i32) -> (i32, i32, i32) {
    %c0_i32 = arith.constant 0 : i32
    %c0_i32_0 = arith.constant 0 : i32
    %c0_i32_1 = arith.constant 0 : i32
    return %arg0, %c0_i32, %c0_i32_0 : i32, i32, i32
  }
  func.func @transform_3(%arg0: i32) -> (i32, i32) {
    %c0_i32 = arith.constant 0 : i32
    %c0_i32_0 = arith.constant 0 : i32
    return %arg0, %c0_i32 : i32, i32
  }
  func.func @transform_4(%arg0: i32) -> (i32, i32) {
    %c0_i32 = arith.constant 0 : i32
    %c0_i32_0 = arith.constant 0 : i32
    %c0_i32_1 = arith.constant 0 : i32
    return %c0_i32, %c0_i32_0 : i32, i32
  }
  func.func @transform_5(%arg0: i32) -> (i32, i32) {
    %c0_i32 = arith.constant 0 : i32
    %c0_i32_0 = arith.constant 0 : i32
    %c0_i32_1 = arith.constant 0 : i32
    return %c0_i32, %c0_i32_0 : i32, i32
  }
  func.func @transform_6(%arg0: i32) -> (i32, i32) {
    %c0_i32 = arith.constant 0 : i32
    %c0_i32_0 = arith.constant 0 : i32
    %c0_i32_1 = arith.constant 0 : i32
    return %c0_i32, %c0_i32_0 : i32, i32
  }
  func.func @transform_7(%arg0: i32) -> (i32, i32) {
    %c0_i32 = arith.constant 0 : i32
    %c0_i32_0 = arith.constant 0 : i32
    %c0_i32_1 = arith.constant 0 : i32
    return %c0_i32, %c0_i32_0 : i32, i32
  }
  func.func @transform_8(%arg0: i32) -> (i32, i32) {
    %c0_i32 = arith.constant 0 : i32
    %c0_i32_0 = arith.constant 0 : i32
    %c0_i32_1 = arith.constant 0 : i32
    return %c0_i32, %c0_i32_0 : i32, i32
  }
  func.func @transform_9(%arg0: i32) -> (i32, i32) {
    %c0_i32 = arith.constant 0 : i32
    %c0_i32_0 = arith.constant 0 : i32
    %c0_i32_1 = arith.constant 0 : i32
    return %c0_i32, %c0_i32_0 : i32, i32
  }
  func.func @transform_10(%arg0: i32) -> (i32, i32) {
    %c0_i32 = arith.constant 0 : i32
    %c0_i32_0 = arith.constant 0 : i32
    %c0_i32_1 = arith.constant 0 : i32
    return %c0_i32, %c0_i32_0 : i32, i32
  }
  func.func @transform_11(%arg0: i32) -> (i32, i32) {
    %c0_i32 = arith.constant 0 : i32
    %c0_i32_0 = arith.constant 0 : i32
    %c0_i32_1 = arith.constant 0 : i32
    return %c0_i32, %c0_i32_0 : i32, i32
  }
  func.func @transform_12(%arg0: i32) -> (i32, i32) {
    %c0_i32 = arith.constant 0 : i32
    %c0_i32_0 = arith.constant 0 : i32
    %c0_i32_1 = arith.constant 0 : i32
    return %c0_i32, %c0_i32_0 : i32, i32
  }
  func.func @transform_13(%arg0: i32) -> (i32, i32) {
    %c0_i32 = arith.constant 0 : i32
    %c0_i32_0 = arith.constant 0 : i32
    %c0_i32_1 = arith.constant 0 : i32
    return %c0_i32, %c0_i32_0 : i32, i32
  }
  func.func @transform_14(%arg0: i32) -> (i32, i32) {
    %c0_i32 = arith.constant 0 : i32
    %c0_i32_0 = arith.constant 0 : i32
    %c0_i32_1 = arith.constant 0 : i32
    return %c0_i32, %c0_i32_0 : i32, i32
  }
  func.func @transform_15(%arg0: i32) -> (i32, i32) {
    %c0_i32 = arith.constant 0 : i32
    %c0_i32_0 = arith.constant 0 : i32
    return %arg0, %c0_i32 : i32, i32
  }
}

</mosaic_0001>

<llo_original>
// kernel: tpu_custom_call.1
$region0: #{tpu_custom_call.1}
  #allocation0 [shape = 'u32[]', space=smem, size = 0x4, offset = 0x4, fixed_abs, tag = 'smem constant byte address 0x4 - core index']
  #allocation1 [shape = 'u32[144,128]{1,0:T(1,128)}', space=vmem, size = 0x12000, scoped, tag = 'internal scratch']
  #allocation2 [shape = 'f32[1,1]{1,0:T(1,128)S(1)}', space=vmem, size = 0x200, scoped, tag = 'scoped memory for tpu_custom_call.1']
  %s0 = inlined_call_operand.hbm [shape: bf16[16,8,128], index: 0, kind: input, shape index: {}]
  %s1 = inlined_call_operand.vmem [shape: f32[16,8], index: 1, kind: input, shape index: {}]
  %s2 = inlined_call_operand.hbm [shape: bf16[16,8,128], index: 2, kind: input, shape index: {}]
  %s3 = inlined_call_operand.vmem [shape: f32[16,8], index: 3, kind: input, shape index: {}]
  %s4 = inlined_call_operand.hbm [shape: bf16[128,128], index: 4, kind: input, shape index: {}]
  %s5 = inlined_call_operand.vmem [shape: f32[1,128], index: 5, kind: input, shape index: {}]
  %s6 = inlined_call_operand.hbm [shape: bf16[128,128], index: 6, kind: input, shape index: {}]
  %s7 = inlined_call_operand.vmem [shape: f32[1,128], index: 7, kind: input, shape index: {}]
  %s8 = inlined_call_operand.hbm [shape: f32[128,128], index: 8, kind: input, shape index: {}]
  %s9 = inlined_call_operand.hbm [shape: f32[128,128], index: 9, kind: input, shape index: {}]
  %s10 = inlined_call_operand.vmem [shape: f32[1,128], index: 10, kind: input, shape index: {}]
  %s11 = inlined_call_operand.hbm [shape: f32[128,128], index: 11, kind: input, shape index: {}]
  %s12 = inlined_call_operand.vmem [shape: f32[1,128], index: 12, kind: input, shape index: {}]
  %s13 = inlined_call_operand.vmem [shape: f32[1,128], index: 13, kind: input, shape index: {}]
  %s14 = inlined_call_operand.<no memory space> [shape: f32[1,1], index: 14, kind: input, shape index: {}]
  %s15 = inlined_call_operand.hbm [shape: f32[16,128], index: 15, kind: output, shape index: {}]
  %s16 = sld [smem:[#allocation0]]
  $region121: #{tpu_custom_call.1} parent=0
    _
  %s18 = ssub.s32 1, %s16
  %s19 = scalar_select 0, %s18, %s16
  %v20 = vstv %s14
  %21 = vst [vmem:[#allocation2] sm:$0x1] %v20
  $region1: #{tpu_custom_call.1} parent=0
    #allocation3 [shape = 'u8[32768]{0}', space=vmem, size = 0x8000, scoped, tag = 'input window, operand 0']
    #allocation4 [shape = 's32[2]{0}', space=sflag, size = 0x8, scoped, tag = 'scoped memory for tpu_custom_call.1']
    #allocation5 [shape = 's32[2]{0}', space=sflag, size = 0x8, scoped, tag = 'scoped memory for tpu_custom_call.1']
    #allocation6 [shape = 'u8[32768]{0}', space=vmem, size = 0x8000, scoped, tag = 'input window, operand 2']
    #allocation7 [shape = 's32[2]{0}', space=sflag, size = 0x8, scoped, tag = 'scoped memory for tpu_custom_call.1']
    #allocation8 [shape = 'u8[32768]{0}', space=vmem, size = 0x8000, scoped, tag = 'input window, operand 4, single buffered']
    #allocation9 [shape = 'u8[32768]{0}', space=vmem, size = 0x8000, scoped, tag = 'input window, operand 6, single buffered']
    #allocation10 [shape = 's32[1]{0}', space=sflag, size = 0x4, scoped, tag = 'scoped memory for tpu_custom_call.1']
    #allocation11 [shape = 'u8[65536]{0}', space=vmem, size = 0x10000, scoped, tag = 'input window, operand 8, single buffered']
    #allocation12 [shape = 'u8[65536]{0}', space=vmem, size = 0x10000, scoped, tag = 'input window, operand 9, single buffered']
    #allocation13 [shape = 's32[1]{0}', space=sflag, size = 0x4, scoped, tag = 'scoped memory for tpu_custom_call.1']
    #allocation14 [shape = 'u8[65536]{0}', space=vmem, size = 0x10000, scoped, tag = 'input window, operand 11, single buffered']
    #allocation15 [shape = 'u8[8192]{0}', space=vmem, size = 0x2000, scoped, tag = 'output window, operand 0']
    %22 = vsyncpa [#allocation4], 0
    %s23 = scalar_lea.sflag [#allocation4], 1
    %24 = vsyncpa %s23, 0
    %25 = vsyncpa [#allocation7], 0
    %s26 = scalar_lea.sflag [#allocation7], 1
    %27 = vsyncpa %s26, 0
    %28 = vsyncpa [#allocation10], 0
    %29 = vsyncpa [#allocation13], 0
    %30 = vsyncpa [#allocation5], 0
    %s31 = scalar_lea.sflag [#allocation5], 1
    %32 = vsyncpa %s31, 0
    loop: start=0, step=1, limit=4
    $region2: #{tpu_custom_call.1} parent=1 // loop_pre_header
      _
    $region3: #{tpu_custom_call.1} parent=1 // loop_header
      %s34 = sphi 0, %s38
      %p35 = scmp.ge.s32.totalorder %s34, 4
      %s44 = sphi 0, %s46
      %s47 = sphi 0, %s44
      %s48 = sphi 0, %s47
      %s64 = sphi 0, %s48
      %s70 = sphi 0, %s72
      %s73 = sphi 0, %s70
      %s74 = sphi 0, %s73
      %s90 = sphi 0, %s74
      %s96 = sphi 0, %s98
      %s99 = sphi 0, %s96
      %s100 = sphi 0, %s99
      %s116 = sphi 0, %s100
      %s122 = sphi 0, %s124
      %s125 = sphi 0, %s122
      %s126 = sphi 0, %s125
      %s142 = sphi 0, %s126
      %s146 = sphi 0, %s146
      %s148 = sphi 0, %s146
      %s149 = sphi 0, %s148
      %s163 = sphi 0, %s149
      %s167 = sphi 0, %s167
      %s169 = sphi 0, %s167
      %s170 = sphi 0, %s169
      %s184 = sphi 0, %s170
      %s188 = sphi 0, %s188
      %s190 = sphi 0, %s188
      %s191 = sphi 0, %s190
      %s205 = sphi 0, %s191
      %s209 = sphi 0, %s209
      %s211 = sphi 0, %s209
      %s212 = sphi 0, %s211
      %s226 = sphi 0, %s212
      %s230 = sphi 0, %s230
      %s232 = sphi 0, %s230
      %s233 = sphi 0, %s232
      %s247 = sphi 0, %s233
      %s251 = sphi 0, %s251
      %s253 = sphi 0, %s251
      %s254 = sphi 0, %s253
      %s268 = sphi 0, %s254
      %s272 = sphi 0, %s272
      %s274 = sphi 0, %s272
      %s275 = sphi 0, %s274
      %s289 = sphi 0, %s275
      %s293 = sphi 0, %s293
      %s295 = sphi 0, %s293
      %s296 = sphi 0, %s295
      %s310 = sphi 0, %s296
      %s314 = sphi 0, %s314
      %s316 = sphi 0, %s314
      %s317 = sphi 0, %s316
      %s331 = sphi 0, %s317
      %s335 = sphi 0, %s335
      %s337 = sphi 0, %s335
      %s338 = sphi 0, %s337
      %s352 = sphi 0, %s338
      %s356 = sphi 0, %s356
      %s358 = sphi 0, %s356
      %s359 = sphi 0, %s358
      %s373 = sphi 0, %s359
      %s379 = sphi 0, %s381
      %s382 = sphi 0, %s379
      %s383 = sphi 0, %s382
      %s399 = sphi 0, %s383
    $region4: #{tpu_custom_call.1} parent=1 // loop_header_branch
      %37 = sbr.rel (%p35) target = $region8
    $region5: #{tpu_custom_call.1} parent=1 // loop_body
      %s39 = ssub.s32 %s34, 1
      %s40 = ssub.s32 %s34, 2
      %s41 = sadd.s32 %s34, 1
      %s42 = ssub.s32 %s34, %s41
      %p43 = scmp.eq.s32.totalorder %s42, 0
      %s45 = sadd.s32 %s44, 1
      %s46 = scalar_select %p43, %s44, %s45
      %p49 = pneg %p43
      %p50 = scmp.eq.s32.totalorder %s34, 1
      %p51 = por %p49, %p50
      %p52 = scmp.ne.s32.totalorder %s44, %s47
      %p53 = scmp.eq.s32.totalorder %s34, 0
      %p54 = por %p52, %p53
      %p55 = scmp.ne.s32.totalorder %s44, %s47
      %p56 = scmp.eq.s32.totalorder %s39, 1
      %p57 = por %p55, %p56
      %p58 = scmp.ne.s32.totalorder %s47, %s48
      %p59 = scmp.eq.s32.totalorder %s39, 0
      %p60 = por %p58, %p59
      %p61 = scmp.ne.s32.totalorder %s47, %s48
      %p62 = scmp.eq.s32.totalorder %s40, 1
      %p63 = por %p61, %p62
      %p65 = scmp.ne.s32.totalorder %s48, %s64
      %p66 = scmp.eq.s32.totalorder %s40, 0
      %p67 = por %p65, %p66
      %s68 = ssub.s32 %s34, %s41
      %p69 = scmp.eq.s32.totalorder %s68, 0
      %s71 = sadd.s32 %s70, 1
      %s72 = scalar_select %p69, %s70, %s71
      %p75 = pneg %p69
      %p76 = scmp.eq.s32.totalorder %s34, 1
      %p77 = por %p75, %p76
      %p78 = scmp.ne.s32.totalorder %s70, %s73
      %p79 = scmp.eq.s32.totalorder %s34, 0
      %p80 = por %p78, %p79
      %p81 = scmp.ne.s32.totalorder %s70, %s73
      %p82 = scmp.eq.s32.totalorder %s39, 1
      %p83 = por %p81, %p82
      %p84 = scmp.ne.s32.totalorder %s73, %s74
      %p85 = scmp.eq.s32.totalorder %s39, 0
      %p86 = por %p84, %p85
      %p87 = scmp.ne.s32.totalorder %s73, %s74
      %p88 = scmp.eq.s32.totalorder %s40, 1
      %p89 = por %p87, %p88
      %p91 = scmp.ne.s32.totalorder %s74, %s90
      %p92 = scmp.eq.s32.totalorder %s40, 0
      %p93 = por %p91, %p92
      %s94 = ssub.s32 %s34, %s41
      %p95 = scmp.eq.s32.totalorder %s94, 0
      %s97 = sadd.s32 %s96, 1
      %s98 = scalar_select %p95, %s96, %s97
      %p101 = pneg %p95
      %p102 = scmp.eq.s32.totalorder %s34, 1
      %p103 = por %p101, %p102
      %p104 = scmp.ne.s32.totalorder %s96, %s99
      %p105 = scmp.eq.s32.totalorder %s34, 0
      %p106 = por %p104, %p105
      %p107 = scmp.ne.s32.totalorder %s96, %s99
      %p108 = scmp.eq.s32.totalorder %s39, 1
      %p109 = por %p107, %p108
      %p110 = scmp.ne.s32.totalorder %s99, %s100
      %p111 = scmp.eq.s32.totalorder %s39, 0
      %p112 = por %p110, %p111
      %p113 = scmp.ne.s32.totalorder %s99, %s100
      %p114 = scmp.eq.s32.totalorder %s40, 1
      %p115 = por %p113, %p114
      %p117 = scmp.ne.s32.totalorder %s100, %s116
      %p118 = scmp.eq.s32.totalorder %s40, 0
      %p119 = por %p117, %p118
      %s120 = ssub.s32 %s34, %s41
      %p121 = scmp.eq.s32.totalorder %s120, 0
      %s123 = sadd.s32 %s122, 1
      %s124 = scalar_select %p121, %s122, %s123
      %p127 = pneg %p121
      %p128 = scmp.eq.s32.totalorder %s34, 1
      %p129 = por %p127, %p128
      %p130 = scmp.ne.s32.totalorder %s122, %s125
      %p131 = scmp.eq.s32.totalorder %s34, 0
      %p132 = por %p130, %p131
      %p133 = scmp.ne.s32.totalorder %s122, %s125
      %p134 = scmp.eq.s32.totalorder %s39, 1
      %p135 = por %p133, %p134
      %p136 = scmp.ne.s32.totalorder %s125, %s126
      %p137 = scmp.eq.s32.totalorder %s39, 0
      %p138 = por %p136, %p137
      %p139 = scmp.ne.s32.totalorder %s125, %s126
      %p140 = scmp.eq.s32.totalorder %s40, 1
      %p141 = por %p139, %p140
      %p143 = scmp.ne.s32.totalorder %s126, %s142
      %p144 = scmp.eq.s32.totalorder %s40, 0
      %p145 = por %p143, %p144
      %s147 = sadd.s32 %s146, 1
      %p150 = scmp.eq.s32.totalorder %s34, 1
      %p151 = scmp.ne.s32.totalorder %s146, %s148
      %p152 = scmp.eq.s32.totalorder %s34, 0
      %p153 = por %p151, %p152
      %p154 = scmp.ne.s32.totalorder %s146, %s148
      %p155 = scmp.eq.s32.totalorder %s39, 1
      %p156 = por %p154, %p155
      %p157 = scmp.ne.s32.totalorder %s148, %s149
      %p158 = scmp.eq.s32.totalorder %s39, 0
      %p159 = por %p157, %p158
      %p160 = scmp.ne.s32.totalorder %s148, %s149
      %p161 = scmp.eq.s32.totalorder %s40, 1
      %p162 = por %p160, %p161
      %p164 = scmp.ne.s32.totalorder %s149, %s163
      %p165 = scmp.eq.s32.totalorder %s40, 0
      %p166 = por %p164, %p165
      %s168 = sadd.s32 %s167, 1
      %p171 = scmp.eq.s32.totalorder %s34, 1
      %p172 = scmp.ne.s32.totalorder %s167, %s169
      %p173 = scmp.eq.s32.totalorder %s34, 0
      %p174 = por %p172, %p173
      %p175 = scmp.ne.s32.totalorder %s167, %s169
      %p176 = scmp.eq.s32.totalorder %s39, 1
      %p177 = por %p175, %p176
      %p178 = scmp.ne.s32.totalorder %s169, %s170
      %p179 = scmp.eq.s32.totalorder %s39, 0
      %p180 = por %p178, %p179
      %p181 = scmp.ne.s32.totalorder %s169, %s170
      %p182 = scmp.eq.s32.totalorder %s40, 1
      %p183 = por %p181, %p182
      %p185 = scmp.ne.s32.totalorder %s170, %s184
      %p186 = scmp.eq.s32.totalorder %s40, 0
      %p187 = por %p185, %p186
      %s189 = sadd.s32 %s188, 1
      %p192 = scmp.eq.s32.totalorder %s34, 1
      %p193 = scmp.ne.s32.totalorder %s188, %s190
      %p194 = scmp.eq.s32.totalorder %s34, 0
      %p195 = por %p193, %p194
      %p196 = scmp.ne.s32.totalorder %s188, %s190
      %p197 = scmp.eq.s32.totalorder %s39, 1
      %p198 = por %p196, %p197
      %p199 = scmp.ne.s32.totalorder %s190, %s191
      %p200 = scmp.eq.s32.totalorder %s39, 0
      %p201 = por %p199, %p200
      %p202 = scmp.ne.s32.totalorder %s190, %s191
      %p203 = scmp.eq.s32.totalorder %s40, 1
      %p204 = por %p202, %p203
      %p206 = scmp.ne.s32.totalorder %s191, %s205
      %p207 = scmp.eq.s32.totalorder %s40, 0
      %p208 = por %p206, %p207
      %s210 = sadd.s32 %s209, 1
      %p213 = scmp.eq.s32.totalorder %s34, 1
      %p214 = scmp.ne.s32.totalorder %s209, %s211
      %p215 = scmp.eq.s32.totalorder %s34, 0
      %p216 = por %p214, %p215
      %p217 = scmp.ne.s32.totalorder %s209, %s211
      %p218 = scmp.eq.s32.totalorder %s39, 1
      %p219 = por %p217, %p218
      %p220 = scmp.ne.s32.totalorder %s211, %s212
      %p221 = scmp.eq.s32.totalorder %s39, 0
      %p222 = por %p220, %p221
      %p223 = scmp.ne.s32.totalorder %s211, %s212
      %p224 = scmp.eq.s32.totalorder %s40, 1
      %p225 = por %p223, %p224
      %p227 = scmp.ne.s32.totalorder %s212, %s226
      %p228 = scmp.eq.s32.totalorder %s40, 0
      %p229 = por %p227, %p228
      %s231 = sadd.s32 %s230, 1
      %p234 = scmp.eq.s32.totalorder %s34, 1
      %p235 = scmp.ne.s32.totalorder %s230, %s232
      %p236 = scmp.eq.s32.totalorder %s34, 0
      %p237 = por %p235, %p236
      %p238 = scmp.ne.s32.totalorder %s230, %s232
      %p239 = scmp.eq.s32.totalorder %s39, 1
      %p240 = por %p238, %p239
      %p241 = scmp.ne.s32.totalorder %s232, %s233
      %p242 = scmp.eq.s32.totalorder %s39, 0
      %p243 = por %p241, %p242
      %p244 = scmp.ne.s32.totalorder %s232, %s233
      %p245 = scmp.eq.s32.totalorder %s40, 1
      %p246 = por %p244, %p245
      %p248 = scmp.ne.s32.totalorder %s233, %s247
      %p249 = scmp.eq.s32.totalorder %s40, 0
      %p250 = por %p248, %p249
      %s252 = sadd.s32 %s251, 1
      %p255 = scmp.eq.s32.totalorder %s34, 1
      %p256 = scmp.ne.s32.totalorder %s251, %s253
      %p257 = scmp.eq.s32.totalorder %s34, 0
      %p258 = por %p256, %p257
      %p259 = scmp.ne.s32.totalorder %s251, %s253
      %p260 = scmp.eq.s32.totalorder %s39, 1
      %p261 = por %p259, %p260
      %p262 = scmp.ne.s32.totalorder %s253, %s254
      %p263 = scmp.eq.s32.totalorder %s39, 0
      %p264 = por %p262, %p263
      %p265 = scmp.ne.s32.totalorder %s253, %s254
      %p266 = scmp.eq.s32.totalorder %s40, 1
      %p267 = por %p265, %p266
      %p269 = scmp.ne.s32.totalorder %s254, %s268
      %p270 = scmp.eq.s32.totalorder %s40, 0
      %p271 = por %p269, %p270
      %s273 = sadd.s32 %s272, 1
      %p276 = scmp.eq.s32.totalorder %s34, 1
      %p277 = scmp.ne.s32.totalorder %s272, %s274
      %p278 = scmp.eq.s32.totalorder %s34, 0
      %p279 = por %p277, %p278
      %p280 = scmp.ne.s32.totalorder %s272, %s274
      %p281 = scmp.eq.s32.totalorder %s39, 1
      %p282 = por %p280, %p281
      %p283 = scmp.ne.s32.totalorder %s274, %s275
      %p284 = scmp.eq.s32.totalorder %s39, 0
      %p285 = por %p283, %p284
      %p286 = scmp.ne.s32.totalorder %s274, %s275
      %p287 = scmp.eq.s32.totalorder %s40, 1
      %p288 = por %p286, %p287
      %p290 = scmp.ne.s32.totalorder %s275, %s289
      %p291 = scmp.eq.s32.totalorder %s40, 0
      %p292 = por %p290, %p291
      %s294 = sadd.s32 %s293, 1
      %p297 = scmp.eq.s32.totalorder %s34, 1
      %p298 = scmp.ne.s32.totalorder %s293, %s295
      %p299 = scmp.eq.s32.totalorder %s34, 0
      %p300 = por %p298, %p299
      %p301 = scmp.ne.s32.totalorder %s293, %s295
      %p302 = scmp.eq.s32.totalorder %s39, 1
      %p303 = por %p301, %p302
      %p304 = scmp.ne.s32.totalorder %s295, %s296
      %p305 = scmp.eq.s32.totalorder %s39, 0
      %p306 = por %p304, %p305
      %p307 = scmp.ne.s32.totalorder %s295, %s296
      %p308 = scmp.eq.s32.totalorder %s40, 1
      %p309 = por %p307, %p308
      %p311 = scmp.ne.s32.totalorder %s296, %s310
      %p312 = scmp.eq.s32.totalorder %s40, 0
      %p313 = por %p311, %p312
      %s315 = sadd.s32 %s314, 1
      %p318 = scmp.eq.s32.totalorder %s34, 1
      %p319 = scmp.ne.s32.totalorder %s314, %s316
      %p320 = scmp.eq.s32.totalorder %s34, 0
      %p321 = por %p319, %p320
      %p322 = scmp.ne.s32.totalorder %s314, %s316
      %p323 = scmp.eq.s32.totalorder %s39, 1
      %p324 = por %p322, %p323
      %p325 = scmp.ne.s32.totalorder %s316, %s317
      %p326 = scmp.eq.s32.totalorder %s39, 0
      %p327 = por %p325, %p326
      %p328 = scmp.ne.s32.totalorder %s316, %s317
      %p329 = scmp.eq.s32.totalorder %s40, 1
      %p330 = por %p328, %p329
      %p332 = scmp.ne.s32.totalorder %s317, %s331
      %p333 = scmp.eq.s32.totalorder %s40, 0
      %p334 = por %p332, %p333
      %s336 = sadd.s32 %s335, 1
      %p339 = scmp.eq.s32.totalorder %s34, 1
      %p340 = scmp.ne.s32.totalorder %s335, %s337
      %p341 = scmp.eq.s32.totalorder %s34, 0
      %p342 = por %p340, %p341
      %p343 = scmp.ne.s32.totalorder %s335, %s337
      %p344 = scmp.eq.s32.totalorder %s39, 1
      %p345 = por %p343, %p344
      %p346 = scmp.ne.s32.totalorder %s337, %s338
      %p347 = scmp.eq.s32.totalorder %s39, 0
      %p348 = por %p346, %p347
      %p349 = scmp.ne.s32.totalorder %s337, %s338
      %p350 = scmp.eq.s32.totalorder %s40, 1
      %p351 = por %p349, %p350
      %p353 = scmp.ne.s32.totalorder %s338, %s352
      %p354 = scmp.eq.s32.totalorder %s40, 0
      %p355 = por %p353, %p354
      %s357 = sadd.s32 %s356, 1
      %p360 = scmp.eq.s32.totalorder %s34, 1
      %p361 = scmp.ne.s32.totalorder %s356, %s358
      %p362 = scmp.eq.s32.totalorder %s34, 0
      %p363 = por %p361, %p362
      %p364 = scmp.ne.s32.totalorder %s356, %s358
      %p365 = scmp.eq.s32.totalorder %s39, 1
      %p366 = por %p364, %p365
      %p367 = scmp.ne.s32.totalorder %s358, %s359
      %p368 = scmp.eq.s32.totalorder %s39, 0
      %p369 = por %p367, %p368
      %p370 = scmp.ne.s32.totalorder %s358, %s359
      %p371 = scmp.eq.s32.totalorder %s40, 1
      %p372 = por %p370, %p371
      %p374 = scmp.ne.s32.totalorder %s359, %s373
      %p375 = scmp.eq.s32.totalorder %s40, 0
      %p376 = por %p374, %p375
      %s377 = ssub.s32 %s34, %s41
      %p378 = scmp.eq.s32.totalorder %s377, 0
      %s380 = sadd.s32 %s379, 1
      %s381 = scalar_select %p378, %s379, %s380
      %p384 = pneg %p378
      %p385 = scmp.eq.s32.totalorder %s34, 1
      %p386 = por %p384, %p385
      %p387 = scmp.ne.s32.totalorder %s379, %s382
      %p388 = scmp.eq.s32.totalorder %s34, 0
      %p389 = por %p387, %p388
      %p390 = scmp.ne.s32.totalorder %s379, %s382
      %p391 = scmp.eq.s32.totalorder %s39, 1
      %p392 = por %p390, %p391
      %p393 = scmp.ne.s32.totalorder %s382, %s383
      %p394 = scmp.eq.s32.totalorder %s39, 0
      %p395 = por %p393, %p394
      %p396 = scmp.ne.s32.totalorder %s382, %s383
      %p397 = scmp.eq.s32.totalorder %s40, 1
      %p398 = por %p396, %p397
      %p400 = scmp.ne.s32.totalorder %s383, %s399
      %p401 = scmp.eq.s32.totalorder %s40, 0
      %p402 = por %p400, %p401
      %p403 = scmp.le.s32.totalorder 1, %s34
      %p404 = scmp.lt.s32.totalorder %s34, 3
      %p405 = pnand %p403, %p404
      %p406 = pneg %p405
      // Predicated region
      $region9: #{tpu_custom_call.1} parent=5 // pred_check
        _
      $region10: #{tpu_custom_call.1} parent=5 // pred_check_branch
        %408 = sbr.rel (%p405) target = $region12
      $region11: #{tpu_custom_call.1} parent=5 // pred_region
        %s409 = ssub.s32 %s34, 1
        // Predicated region
        $region13: #{tpu_custom_call.1} parent=11 // pred_check
          %p410 = pneg %p159
        $region14: #{tpu_custom_call.1} parent=11 // pred_check_branch
          %412 = sbr.rel (%p410) target = $region16
        $region15: #{tpu_custom_call.1} parent=11 // pred_region
          %s414 = ssub.s32 1024, 1024
          %415 = vsyncadd [#allocation7], %s414
          %s416 = sshll.u32 [#allocation8], 4
          %s417 = int_to_ptr.vmem [resolvable:$true] %s416
          %422 = dma.hbm_to_vmem [thread:$0]  %s4, 1024, %s417, [#allocation7], 64, 64, 4
        $region16: #{tpu_custom_call.1} parent=11 // pred_fallthru
          _
        // Predicated region
        $region17: #{tpu_custom_call.1} parent=11 // pred_check
          %p423 = pneg %p180
        $region18: #{tpu_custom_call.1} parent=11 // pred_check_branch
          %425 = sbr.rel (%p423) target = $region20
        $region19: #{tpu_custom_call.1} parent=11 // pred_region
          _
        $region20: #{tpu_custom_call.1} parent=11 // pred_fallthru
          _
        // Predicated region
        $region21: #{tpu_custom_call.1} parent=11 // pred_check
          %p426 = pneg %p201
        $region22: #{tpu_custom_call.1} parent=11 // pred_check_branch
          %428 = sbr.rel (%p426) target = $region24
        $region23: #{tpu_custom_call.1} parent=11 // pred_region
          %s430 = ssub.s32 1024, 1024
          %431 = vsyncadd [#allocation10], %s430
          %s432 = sshll.u32 [#allocation9], 4
          %s433 = int_to_ptr.vmem [resolvable:$true] %s432
          %438 = dma.hbm_to_vmem [thread:$0]  %s6, 1024, %s433, [#allocation10], 64, 64, 4
        $region24: #{tpu_custom_call.1} parent=11 // pred_fallthru
          _
        // Predicated region
        $region25: #{tpu_custom_call.1} parent=11 // pred_check
          %p439 = pneg %p222
        $region26: #{tpu_custom_call.1} parent=11 // pred_check_branch
          %441 = sbr.rel (%p439) target = $region28
        $region27: #{tpu_custom_call.1} parent=11 // pred_region
          _
        $region28: #{tpu_custom_call.1} parent=11 // pred_fallthru
          _
        // Predicated region
        $region29: #{tpu_custom_call.1} parent=11 // pred_check
          %p442 = pneg %p243
        $region30: #{tpu_custom_call.1} parent=11 // pred_check_branch
          %444 = sbr.rel (%p442) target = $region32
        $region31: #{tpu_custom_call.1} parent=11 // pred_region
          %s446 = ssub.s32 2048, 2048
          %447 = vsyncadd [#allocation10], %s446
          %s448 = sshll.u32 [#allocation11], 4
          %s449 = int_to_ptr.vmem [resolvable:$true] %s448
          %454 = dma.hbm_to_vmem [thread:$0]  %s8, 2048, %s449, [#allocation10], 128, 128, 8
        $region32: #{tpu_custom_call.1} parent=11 // pred_fallthru
          _
        // Predicated region
        $region33: #{tpu_custom_call.1} parent=11 // pred_check
          %p455 = pneg %p264
        $region34: #{tpu_custom_call.1} parent=11 // pred_check_branch
          %457 = sbr.rel (%p455) target = $region36
        $region35: #{tpu_custom_call.1} parent=11 // pred_region
          %s459 = ssub.s32 2048, 2048
          %460 = vsyncadd [#allocation13], %s459
          %s461 = sshll.u32 [#allocation12], 4
          %s462 = int_to_ptr.vmem [resolvable:$true] %s461
          %467 = dma.hbm_to_vmem [thread:$0]  %s9, 2048, %s462, [#allocation13], 128, 128, 8
        $region36: #{tpu_custom_call.1} parent=11 // pred_fallthru
          _
        // Predicated region
        $region37: #{tpu_custom_call.1} parent=11 // pred_check
          %p468 = pneg %p285
        $region38: #{tpu_custom_call.1} parent=11 // pred_check_branch
          %470 = sbr.rel (%p468) target = $region40
        $region39: #{tpu_custom_call.1} parent=11 // pred_region
          _
        $region40: #{tpu_custom_call.1} parent=11 // pred_fallthru
          _
        // Predicated region
        $region41: #{tpu_custom_call.1} parent=11 // pred_check
          %p471 = pneg %p306
        $region42: #{tpu_custom_call.1} parent=11 // pred_check_branch
          %473 = sbr.rel (%p471) target = $region44
        $region43: #{tpu_custom_call.1} parent=11 // pred_region
          %s475 = ssub.s32 2048, 2048
          %476 = vsyncadd [#allocation13], %s475
          %s477 = sshll.u32 [#allocation14], 4
          %s478 = int_to_ptr.vmem [resolvable:$true] %s477
          %483 = dma.hbm_to_vmem [thread:$0]  %s11, 2048, %s478, [#allocation13], 128, 128, 8
        $region44: #{tpu_custom_call.1} parent=11 // pred_fallthru
          _
        // Predicated region
        $region45: #{tpu_custom_call.1} parent=11 // pred_check
          %p484 = pneg %p327
        $region46: #{tpu_custom_call.1} parent=11 // pred_check_branch
          %486 = sbr.rel (%p484) target = $region48
        $region47: #{tpu_custom_call.1} parent=11 // pred_region
          _
        $region48: #{tpu_custom_call.1} parent=11 // pred_fallthru
          _
        // Predicated region
        $region49: #{tpu_custom_call.1} parent=11 // pred_check
          %p487 = pneg %p348
        $region50: #{tpu_custom_call.1} parent=11 // pred_check_branch
          %489 = sbr.rel (%p487) target = $region52
        $region51: #{tpu_custom_call.1} parent=11 // pred_region
          _
        $region52: #{tpu_custom_call.1} parent=11 // pred_fallthru
          _
        // Predicated region
        $region53: #{tpu_custom_call.1} parent=11 // pred_check
          %p490 = pneg %p369
        $region54: #{tpu_custom_call.1} parent=11 // pred_check_branch
          %492 = sbr.rel (%p490) target = $region56
        $region55: #{tpu_custom_call.1} parent=11 // pred_region
          _
        $region56: #{tpu_custom_call.1} parent=11 // pred_fallthru
          _
      $region12: #{tpu_custom_call.1} parent=5 // pred_fallthru
        _
      %p493 = scmp.lt.s32.totalorder %s34, 2
      // Predicated region
      $region57: #{tpu_custom_call.1} parent=5 // pred_check
        %p494 = pneg %p493
      $region58: #{tpu_custom_call.1} parent=5 // pred_check_branch
        %496 = sbr.rel (%p494) target = $region60
      $region59: #{tpu_custom_call.1} parent=5 // pred_region
        // Predicated region
        $region61: #{tpu_custom_call.1} parent=59 // pred_check
          %p497 = pneg %p54
        $region62: #{tpu_custom_call.1} parent=59 // pred_check_branch
          %499 = sbr.rel (%p497) target = $region64
        $region63: #{tpu_custom_call.1} parent=59 // pred_region
          %s500 = sand.u32 %s44, 1
          %s501 = scalar_lea.sflag [#allocation4], %s500
          %s502 = sand.u32 %s44, 1
          %s503 = smul.addr %s502, 32
          %s504 = scalar_lea.vmem [#allocation3], %s503
          %s505 = smul.u32 8, %s34
          %s507 = ssub.s32 512, 512
          %508 = vsyncadd %s501, %s507
          %s509 = smul.addr %s505, 64
          %s510 = scalar_lea.hbm %s0, %s509
          %s511 = sshll.u32 %s504, 4
          %s512 = int_to_ptr.vmem [resolvable:$true] %s511
          %517 = dma.hbm_to_vmem [thread:$0]  %s510, 512, %s512, %s501, 64, 64, 4
        $region64: #{tpu_custom_call.1} parent=59 // pred_fallthru
          _
        // Predicated region
        $region65: #{tpu_custom_call.1} parent=59 // pred_check
          %p518 = pneg %p80
        $region66: #{tpu_custom_call.1} parent=59 // pred_check_branch
          %520 = sbr.rel (%p518) target = $region68
        $region67: #{tpu_custom_call.1} parent=59 // pred_region
          %p521 = scmp.lt.s32.totalorder %s34, 1
          %s522 = scalar_select %p521, %s34, 1
          %s523 = smul.addr %s522, 8
          %s524 = scalar_lea.vmem %s1, %s523
        $region68: #{tpu_custom_call.1} parent=59 // pred_fallthru
          _
        // Predicated region
        $region69: #{tpu_custom_call.1} parent=59 // pred_check
          %p525 = pneg %p106
        $region70: #{tpu_custom_call.1} parent=59 // pred_check_branch
          %527 = sbr.rel (%p525) target = $region72
        $region71: #{tpu_custom_call.1} parent=59 // pred_region
          %s528 = sand.u32 %s34, 1
          %s529 = scalar_lea.sflag [#allocation7], %s528
          %s530 = sand.u32 %s96, 1
          %s531 = smul.addr %s530, 32
          %s532 = scalar_lea.vmem [#allocation6], %s531
          %s533 = smul.u32 8, %s34
          %s535 = ssub.s32 512, 512
          %536 = vsyncadd %s529, %s535
          %s537 = smul.addr %s533, 64
          %s538 = scalar_lea.hbm %s2, %s537
          %s539 = sshll.u32 %s532, 4
          %s540 = int_to_ptr.vmem [resolvable:$true] %s539
          %545 = dma.hbm_to_vmem [thread:$0]  %s538, 512, %s540, %s529, 64, 64, 4
        $region72: #{tpu_custom_call.1} parent=59 // pred_fallthru
          _
        // Predicated region
        $region73: #{tpu_custom_call.1} parent=59 // pred_check
          %p546 = pneg %p132
        $region74: #{tpu_custom_call.1} parent=59 // pred_check_branch
          %548 = sbr.rel (%p546) target = $region76
        $region75: #{tpu_custom_call.1} parent=59 // pred_region
          %p549 = scmp.lt.s32.totalorder %s34, 1
          %s550 = scalar_select %p549, %s34, 1
          %s551 = smul.addr %s550, 8
          %s552 = scalar_lea.vmem %s3, %s551
        $region76: #{tpu_custom_call.1} parent=59 // pred_fallthru
          _
      $region60: #{tpu_custom_call.1} parent=5 // pred_fallthru
        _
      %p553 = scmp.le.s32.totalorder 1, %s34
      %p554 = scmp.lt.s32.totalorder %s34, 3
      %p555 = pnand %p553, %p554
      %p556 = pneg %p555
      // Predicated region
      $region77: #{tpu_custom_call.1} parent=5 // pred_check
        _
      $region78: #{tpu_custom_call.1} parent=5 // pred_check_branch
        %558 = sbr.rel (%p555) target = $region80
      $region79: #{tpu_custom_call.1} parent=5 // pred_region
        %s559 = ssub.s32 %s34, 1
        %s560 = sand.u32 %s47, 1
        %s561 = scalar_lea.sflag [#allocation4], %s560
        %s562 = sand.u32 %s47, 1
        %s563 = smul.addr %s562, 32
        %s564 = scalar_lea.vmem [#allocation3], %s563
        // Predicated region
        $region81: #{tpu_custom_call.1} parent=79 // pred_check
          %p565 = pneg %p60
        $region82: #{tpu_custom_call.1} parent=79 // pred_check_branch
          %567 = sbr.rel (%p565) target = $region84
        $region83: #{tpu_custom_call.1} parent=79 // pred_region
          %568 = dma.done %s561, 512
        $region84: #{tpu_custom_call.1} parent=79 // pred_fallthru
          _
        %s569 = sand.u32 %s39, 1
        %s570 = scalar_lea.sflag [#allocation7], %s569
        %s571 = sand.u32 %s99, 1
        %s572 = smul.addr %s571, 32
        %s573 = scalar_lea.vmem [#allocation6], %s572
        // Predicated region
        $region85: #{tpu_custom_call.1} parent=79 // pred_check
          %p574 = pneg %p112
        $region86: #{tpu_custom_call.1} parent=79 // pred_check_branch
          %576 = sbr.rel (%p574) target = $region88
        $region87: #{tpu_custom_call.1} parent=79 // pred_region
          %577 = dma.done %s570, 512
        $region88: #{tpu_custom_call.1} parent=79 // pred_fallthru
          _
        // Predicated region
        $region89: #{tpu_custom_call.1} parent=79 // pred_check
          %p578 = pneg %p159
        $region90: #{tpu_custom_call.1} parent=79 // pred_check_branch
          %580 = sbr.rel (%p578) target = $region92
        $region91: #{tpu_custom_call.1} parent=79 // pred_region
          %581 = dma.done [#allocation7], 1024
        $region92: #{tpu_custom_call.1} parent=79 // pred_fallthru
          _
        // Predicated region
        $region93: #{tpu_custom_call.1} parent=79 // pred_check
          %p582 = pneg %p201
        $region94: #{tpu_custom_call.1} parent=79 // pred_check_branch
          %584 = sbr.rel (%p582) target = $region96
        $region95: #{tpu_custom_call.1} parent=79 // pred_region
          %585 = dma.done [#allocation10], 1024
        $region96: #{tpu_custom_call.1} parent=79 // pred_fallthru
          _
        // Predicated region
        $region97: #{tpu_custom_call.1} parent=79 // pred_check
          %p586 = pneg %p243
        $region98: #{tpu_custom_call.1} parent=79 // pred_check_branch
          %588 = sbr.rel (%p586) target = $region100
        $region99: #{tpu_custom_call.1} parent=79 // pred_region
          %589 = dma.done [#allocation10], 2048
        $region100: #{tpu_custom_call.1} parent=79 // pred_fallthru
          _
        // Predicated region
        $region101: #{tpu_custom_call.1} parent=79 // pred_check
          %p590 = pneg %p264
        $region102: #{tpu_custom_call.1} parent=79 // pred_check_branch
          %592 = sbr.rel (%p590) target = $region104
        $region103: #{tpu_custom_call.1} parent=79 // pred_region
          %593 = dma.done [#allocation13], 2048
        $region104: #{tpu_custom_call.1} parent=79 // pred_fallthru
          _
        // Predicated region
        $region105: #{tpu_custom_call.1} parent=79 // pred_check
          %p594 = pneg %p306
        $region106: #{tpu_custom_call.1} parent=79 // pred_check_branch
          %596 = sbr.rel (%p594) target = $region108
        $region107: #{tpu_custom_call.1} parent=79 // pred_region
          %597 = dma.done [#allocation13], 2048
        $region108: #{tpu_custom_call.1} parent=79 // pred_fallthru
          _
        %s598 = sand.u32 %s47, 1
        %s599 = scalar_lea.sflag [#allocation4], %s598
        %s600 = sand.u32 %s47, 1
        %s601 = smul.addr %s600, 32
        %s602 = scalar_lea.vmem [#allocation3], %s601
        %p603 = pneg %p60
        %p604 = pneg %p57
        %p605 = scmp.lt.s32.totalorder %s39, 1
        %s606 = scalar_select %p605, %s39, 1
        %s607 = smul.addr %s606, 8
        %s608 = scalar_lea.vmem %s1, %s607
        %p609 = pneg %p86
        %p610 = pneg %p83
        %s611 = sand.u32 %s39, 1
        %s612 = scalar_lea.sflag [#allocation7], %s611
        %s613 = sand.u32 %s99, 1
        %s614 = smul.addr %s613, 32
        %s615 = scalar_lea.vmem [#allocation6], %s614
        %p616 = pneg %p112
        %p617 = pneg %p109
        %p618 = scmp.lt.s32.totalorder %s39, 1
        %s619 = scalar_select %p618, %s39, 1
        %s620 = smul.addr %s619, 8
        %s621 = scalar_lea.vmem %s3, %s620
        %p622 = pneg %p138
        %p623 = pneg %p135
        %p624 = pneg %p159
        %p625 = pneg %p156
        %p626 = pneg %p180
        %p627 = pneg %p177
        %p628 = pneg %p201
        %p629 = pneg %p198
        %p630 = pneg %p222
        %p631 = pneg %p219
        %p632 = pneg %p243
        %p633 = pneg %p240
        %p634 = pneg %p264
        %p635 = pneg %p261
        %p636 = pneg %p285
        %p637 = pneg %p282
        %p638 = pneg %p306
        %p639 = pneg %p303
        %p640 = pneg %p327
        %p641 = pneg %p324
        %p642 = pneg %p348
        %p643 = pneg %p345
        %p644 = pneg %p369
        %p645 = pneg %p366
        %p646 = pneg %p395
        %p647 = pneg %p392
        %s648 = sand.u32 %s382, 1
        %s649 = scalar_lea.sflag [#allocation5], %s648
        %s650 = sand.u32 %s382, 1
        %s651 = smul.addr %s650, 8
        %s652 = scalar_lea.vmem [#allocation15], %s651
        %s653 = smul.u32 8, %s39
        %p654 = scmp.lt.s32.totalorder %s39, 1
        %s655 = scalar_select %p654, %s39, 1
        %s656 = smul.addr %s655, 8
        %s657 = scalar_lea.vmem %s1, %s656
        %s658 = smul.u32 8, %s39
        %p659 = scmp.lt.s32.totalorder %s39, 1
        %s660 = scalar_select %p659, %s39, 1
        %s661 = smul.addr %s660, 8
        %s662 = scalar_lea.vmem %s3, %s661
        %v664 = vld [vmem:[%s564] sm:$0xf]
        %v665 = vld [vmem:[%s564 + $0x4] sm:$0xf]
        %v666 = vld [vmem:[%s564 + $0x8] sm:$0xf]
        %v667 = vld [vmem:[%s564 + $0xc] sm:$0xf]
        %v668 = vld [vmem:[%s564 + $0x10] sm:$0xf]
        %v669 = vld [vmem:[%s564 + $0x14] sm:$0xf]
        %v670 = vld [vmem:[%s564 + $0x18] sm:$0xf]
        %v671 = vld [vmem:[%s564 + $0x1c] sm:$0xf]
        %v672 = vld [vmem:[%s573] sm:$0xf]
        %v673 = vld [vmem:[%s573 + $0x4] sm:$0xf]
        %v674 = vld [vmem:[%s573 + $0x8] sm:$0xf]
        %v675 = vld [vmem:[%s573 + $0xc] sm:$0xf]
        %v676 = vld [vmem:[%s573 + $0x10] sm:$0xf]
        %v677 = vld [vmem:[%s573 + $0x14] sm:$0xf]
        %v678 = vld [vmem:[%s573 + $0x18] sm:$0xf]
        %v679 = vld [vmem:[%s573 + $0x1c] sm:$0xf]
        %v680 = vld [vmem:[%s657] sm:$0xff]
        %v681 = vld [vmem:[%s662] sm:$0xff]
        %v682 = vld [vmem:[#allocation8] sm:$0xf]
        %v683 = vld [vmem:[#allocation8 + $0x4] sm:$0xf]
        %v684 = vld [vmem:[#allocation8 + $0x8] sm:$0xf]
        %v685 = vld [vmem:[#allocation8 + $0xc] sm:$0xf]
        %v686 = vld [vmem:[#allocation8 + $0x10] sm:$0xf]
        %v687 = vld [vmem:[#allocation8 + $0x14] sm:$0xf]
        %v688 = vld [vmem:[#allocation8 + $0x18] sm:$0xf]
        %v689 = vld [vmem:[#allocation8 + $0x1c] sm:$0xf]
        %v690 = vld [vmem:[#allocation8 + $0x20] sm:$0xf]
        %v691 = vld [vmem:[#allocation8 + $0x24] sm:$0xf]
        %v692 = vld [vmem:[#allocation8 + $0x28] sm:$0xf]
        %v693 = vld [vmem:[#allocation8 + $0x2c] sm:$0xf]
        %v694 = vld [vmem:[#allocation8 + $0x30] sm:$0xf]
        %v695 = vld [vmem:[#allocation8 + $0x34] sm:$0xf]
        %v696 = vld [vmem:[#allocation8 + $0x38] sm:$0xf]
        %v697 = vld [vmem:[#allocation8 + $0x3c] sm:$0xf]
        %v698 = vld [vmem:[%s5] sm:$0x1]
        %v700 = vlaneseq
        %v701 = vshrl.u32 %v700, 7
        %v702 = vsub.s32 0, %v701
        %v703 = vrot.slane %v698, %v702
        %v713 = vunpack.c.l.b16 %v664
        %v714 = vunpack.c.l.b16 %v665
        %v715 = vunpack.c.l.b16 %v666
        %v716 = vunpack.c.l.b16 %v667
        %v717 = vunpack.c.l.b16 %v668
        %v718 = vunpack.c.l.b16 %v669
        %v719 = vunpack.c.l.b16 %v670
        %v720 = vunpack.c.l.b16 %v671
        %v721 = vpack.c.b16 %v714, %v713
        %v722 = vpack.c.b16 %v716, %v715
        %v723 = vpack.c.b16 %v718, %v717
        %v724 = vpack.c.b16 %v720, %v719
        %v745 = vunpack.c.l.b16 %v682
        %v746 = vunpack.c.l.b16 %v683
        %v747 = vunpack.c.l.b16 %v684
        %v748 = vunpack.c.l.b16 %v685
        %v749 = vunpack.c.l.b16 %v686
        %v750 = vunpack.c.l.b16 %v687
        %v751 = vunpack.c.l.b16 %v688
        %v752 = vunpack.c.l.b16 %v689
        %v753 = vunpack.c.l.b16 %v690
        %v754 = vunpack.c.l.b16 %v691
        %v755 = vunpack.c.l.b16 %v692
        %v756 = vunpack.c.l.b16 %v693
        %v757 = vunpack.c.l.b16 %v694
        %v758 = vunpack.c.l.b16 %v695
        %v759 = vunpack.c.l.b16 %v696
        %v760 = vunpack.c.l.b16 %v697
        %v761 = vpack.c.b16 %v746, %v745
        %v762 = vpack.c.b16 %v748, %v747
        %v763 = vpack.c.b16 %v750, %v749
        %v764 = vpack.c.b16 %v752, %v751
        %v765 = vpack.c.b16 %v754, %v753
        %v766 = vpack.c.b16 %v756, %v755
        %v767 = vpack.c.b16 %v758, %v757
        %v768 = vpack.c.b16 %v760, %v759
        %777 = vmatprep.subr.bf16.mxu0 0
        %778 = vmatpush1.bf16.msra.mxu0 %v768
        %779 = vmatprep.subr.bf16.mxu0 0
        %780 = vmatpush1.bf16.msra.mxu0 %v767
        %781 = vmatprep.subr.bf16.mxu0 0
        %782 = vmatpush1.bf16.msra.mxu0 %v766
        %783 = vmatprep.subr.bf16.mxu0 0
        %784 = vmatpush1.bf16.msra.mxu0 %v765
        %785 = vmatprep.subr.bf16.mxu0 0
        %786 = vmatpush1.bf16.msra.mxu0 %v764
        %787 = vmatprep.subr.bf16.mxu0 0
        %788 = vmatpush1.bf16.msra.mxu0 %v763
        %789 = vmatprep.subr.bf16.mxu0 0
        %790 = vmatpush1.bf16.msra.mxu0 %v762
        %791 = vmatprep.subr.bf16.mxu0 0
        %792 = vmatpush1.bf16.msra.mxu0 %v761
        %793 = vmatprep.subr.bf16.mxu0 0
        %794 = vmatpush2.bf16.msra.mxu0 0
        %795 = vmatprep.subr.bf16.mxu0 0
        %796 = vmatpush2.bf16.msra.mxu0 0
        %797 = vmatprep.subr.bf16.mxu0 0
        %798 = vmatpush2.bf16.msra.mxu0 0
        %799 = vmatprep.subr.bf16.mxu0 0
        %800 = vmatpush2.bf16.msra.mxu0 0
        %801 = vmatprep.subr.bf16.mxu0 0
        %802 = vmatpush2.bf16.msra.mxu0 0
        %803 = vmatprep.subr.bf16.mxu0 0
        %804 = vmatpush2.bf16.msra.mxu0 0
        %805 = vmatprep.subr.bf16.mxu0 0
        %806 = vmatpush2.bf16.msra.mxu0 0
        %807 = vmatprep.subr.bf16.mxu0 0
        %808 = vmatpush2.bf16.msra.mxu0 0
        %809 = vmatprep.mubr.bf16.mxu0 0
        %810 = vmatmul.mubr.bf16.gmra.mxu0 %v721
        %v811 = vpop.f32.mrf.mxu0
        %v812 = vadd.f32 %v703, %v811
        %v813 = vpop.f32.mrf.mxu0
        %v814 = vpop.f32.mrf.mxu0
        %v815 = vadd.f32 %v703, %v814
        %v816 = vpop.f32.mrf.mxu0
        %817 = vmatprep.mubr.bf16.mxu0 0
        %818 = vmatmul.mubr.bf16.gmra.mxu0 %v722
        %v819 = vpop.f32.mrf.mxu0
        %v820 = vadd.f32 %v703, %v819
        %v821 = vpop.f32.mrf.mxu0
        %v822 = vpop.f32.mrf.mxu0
        %v823 = vadd.f32 %v703, %v822
        %v824 = vpop.f32.mrf.mxu0
        %825 = vmatprep.mubr.bf16.mxu0 0
        %826 = vmatmul.mubr.bf16.gmra.mxu0 %v723
        %v827 = vpop.f32.mrf.mxu0
        %v828 = vadd.f32 %v703, %v827
        %v829 = vpop.f32.mrf.mxu0
        %v830 = vpop.f32.mrf.mxu0
        %v831 = vadd.f32 %v703, %v830
        %v832 = vpop.f32.mrf.mxu0
        %833 = vmatprep.mubr.bf16.mxu0 0
        %834 = vmatmul.mubr.bf16.gmra.mxu0 %v724
        %v835 = vpop.f32.mrf.mxu0
        %v836 = vadd.f32 %v703, %v835
        %v837 = vpop.f32.mrf.mxu0
        %v838 = vpop.f32.mrf.mxu0
        %v839 = vadd.f32 %v703, %v838
        %v840 = vpop.f32.mrf.mxu0
        %841 = vdwg.mxu0
        %v842 = vtanh.pop %v812
        %v843 = vtanh.pop %v815
        %v844 = vtanh.pop %v820
        %v845 = vtanh.pop %v823
        %v846 = vtanh.pop %v828
        %v847 = vtanh.pop %v831
        %v848 = vtanh.pop %v836
        %v849 = vtanh.pop %v839
        %v850 = vld [vmem:[#allocation9] sm:$0xf]
        %v851 = vld [vmem:[#allocation9 + $0x4] sm:$0xf]
        %v852 = vld [vmem:[#allocation9 + $0x8] sm:$0xf]
        %v853 = vld [vmem:[#allocation9 + $0xc] sm:$0xf]
        %v854 = vld [vmem:[#allocation9 + $0x10] sm:$0xf]
        %v855 = vld [vmem:[#allocation9 + $0x14] sm:$0xf]
        %v856 = vld [vmem:[#allocation9 + $0x18] sm:$0xf]
        %v857 = vld [vmem:[#allocation9 + $0x1c] sm:$0xf]
        %v858 = vld [vmem:[#allocation9 + $0x20] sm:$0xf]
        %v859 = vld [vmem:[#allocation9 + $0x24] sm:$0xf]
        %v860 = vld [vmem:[#allocation9 + $0x28] sm:$0xf]
        %v861 = vld [vmem:[#allocation9 + $0x2c] sm:$0xf]
        %v862 = vld [vmem:[#allocation9 + $0x30] sm:$0xf]
        %v863 = vld [vmem:[#allocation9 + $0x34] sm:$0xf]
        %v864 = vld [vmem:[#allocation9 + $0x38] sm:$0xf]
        %v865 = vld [vmem:[#allocation9 + $0x3c] sm:$0xf]
        %v866 = vld [vmem:[%s7] sm:$0x1]
        %v868 = vlaneseq
        %v869 = vshrl.u32 %v868, 7
        %v870 = vsub.s32 0, %v869
        %v871 = vrot.slane %v866, %v870
        %v881 = vunpack.c.l.b16 %v672
        %v882 = vunpack.c.l.b16 %v673
        %v883 = vunpack.c.l.b16 %v674
        %v884 = vunpack.c.l.b16 %v675
        %v885 = vunpack.c.l.b16 %v676
        %v886 = vunpack.c.l.b16 %v677
        %v887 = vunpack.c.l.b16 %v678
        %v888 = vunpack.c.l.b16 %v679
        %v889 = vpack.c.b16 %v882, %v881
        %v890 = vpack.c.b16 %v884, %v883
        %v891 = vpack.c.b16 %v886, %v885
        %v892 = vpack.c.b16 %v888, %v887
        %v913 = vunpack.c.l.b16 %v850
        %v914 = vunpack.c.l.b16 %v851
        %v915 = vunpack.c.l.b16 %v852
        %v916 = vunpack.c.l.b16 %v853
        %v917 = vunpack.c.l.b16 %v854
        %v918 = vunpack.c.l.b16 %v855
        %v919 = vunpack.c.l.b16 %v856
        %v920 = vunpack.c.l.b16 %v857
        %v921 = vunpack.c.l.b16 %v858
        %v922 = vunpack.c.l.b16 %v859
        %v923 = vunpack.c.l.b16 %v860
        %v924 = vunpack.c.l.b16 %v861
        %v925 = vunpack.c.l.b16 %v862
        %v926 = vunpack.c.l.b16 %v863
        %v927 = vunpack.c.l.b16 %v864
        %v928 = vunpack.c.l.b16 %v865
        %v929 = vpack.c.b16 %v914, %v913
        %v930 = vpack.c.b16 %v916, %v915
        %v931 = vpack.c.b16 %v918, %v917
        %v932 = vpack.c.b16 %v920, %v919
        %v933 = vpack.c.b16 %v922, %v921
        %v934 = vpack.c.b16 %v924, %v923
        %v935 = vpack.c.b16 %v926, %v925
        %v936 = vpack.c.b16 %v928, %v927
        %945 = vmatprep.subr.bf16.mxu0 0
        %946 = vmatpush1.bf16.msra.mxu0 %v936
        %947 = vmatprep.subr.bf16.mxu0 0
        %948 = vmatpush1.bf16.msra.mxu0 %v935
        %949 = vmatprep.subr.bf16.mxu0 0
        %950 = vmatpush1.bf16.msra.mxu0 %v934
        %951 = vmatprep.subr.bf16.mxu0 0
        %952 = vmatpush1.bf16.msra.mxu0 %v933
        %953 = vmatprep.subr.bf16.mxu0 0
        %954 = vmatpush1.bf16.msra.mxu0 %v932
        %955 = vmatprep.subr.bf16.mxu0 0
        %956 = vmatpush1.bf16.msra.mxu0 %v931
        %957 = vmatprep.subr.bf16.mxu0 0
        %958 = vmatpush1.bf16.msra.mxu0 %v930
        %959 = vmatprep.subr.bf16.mxu0 0
        %960 = vmatpush1.bf16.msra.mxu0 %v929
        %961 = vmatprep.subr.bf16.mxu0 0
        %962 = vmatpush2.bf16.msra.mxu0 0
        %963 = vmatprep.subr.bf16.mxu0 0
        %964 = vmatpush2.bf16.msra.mxu0 0
        %965 = vmatprep.subr.bf16.mxu0 0
        %966 = vmatpush2.bf16.msra.mxu0 0
        %967 = vmatprep.subr.bf16.mxu0 0
        %968 = vmatpush2.bf16.msra.mxu0 0
        %969 = vmatprep.subr.bf16.mxu0 0
        %970 = vmatpush2.bf16.msra.mxu0 0
        %971 = vmatprep.subr.bf16.mxu0 0
        %972 = vmatpush2.bf16.msra.mxu0 0
        %973 = vmatprep.subr.bf16.mxu0 0
        %974 = vmatpush2.bf16.msra.mxu0 0
        %975 = vmatprep.subr.bf16.mxu0 0
        %976 = vmatpush2.bf16.msra.mxu0 0
        %977 = vmatprep.mubr.bf16.mxu0 0
        %978 = vmatmul.mubr.bf16.gmra.mxu0 %v889
        %v979 = vpop.f32.mrf.mxu0
        %v980 = vadd.f32 %v871, %v979
        %v981 = vpop.f32.mrf.mxu0
        %v982 = vpop.f32.mrf.mxu0
        %v983 = vadd.f32 %v871, %v982
        %v984 = vpop.f32.mrf.mxu0
        %985 = vmatprep.mubr.bf16.mxu0 0
        %986 = vmatmul.mubr.bf16.gmra.mxu0 %v890
        %v987 = vpop.f32.mrf.mxu0
        %v988 = vadd.f32 %v871, %v987
        %v989 = vpop.f32.mrf.mxu0
        %v990 = vpop.f32.mrf.mxu0
        %v991 = vadd.f32 %v871, %v990
        %v992 = vpop.f32.mrf.mxu0
        %993 = vmatprep.mubr.bf16.mxu0 0
        %994 = vmatmul.mubr.bf16.gmra.mxu0 %v891
        %v995 = vpop.f32.mrf.mxu0
        %v996 = vadd.f32 %v871, %v995
        %v997 = vpop.f32.mrf.mxu0
        %v998 = vpop.f32.mrf.mxu0
        %v999 = vadd.f32 %v871, %v998
        %v1000 = vpop.f32.mrf.mxu0
        %1001 = vmatprep.mubr.bf16.mxu0 0
        %1002 = vmatmul.mubr.bf16.gmra.mxu0 %v892
        %v1003 = vpop.f32.mrf.mxu0
        %v1004 = vadd.f32 %v871, %v1003
        %v1005 = vpop.f32.mrf.mxu0
        %v1006 = vpop.f32.mrf.mxu0
        %v1007 = vadd.f32 %v871, %v1006
        %v1008 = vpop.f32.mrf.mxu0
        %1009 = vdwg.mxu0
        %v1010 = vtanh.pop %v980
        %v1011 = vtanh.pop %v983
        %v1012 = vtanh.pop %v988
        %v1013 = vtanh.pop %v991
        %v1014 = vtanh.pop %v996
        %v1015 = vtanh.pop %v999
        %v1016 = vtanh.pop %v1004
        %v1017 = vtanh.pop %v1007
        %v1018 = vlaneseq
        %v1019 = vshrl.u32 %v1018, 7
        %v1020 = vsub.s32 0, %v1019
        %v1021 = vrot.slane %v680, %v1020
        %1023 = vbcast.lane.b32.xlu0 %v1021, 256
        %v1024 = vpop.permute.xlu0 %1023
        %v1025 = vlaneseq
        %v1026 = vshrl.u32 %v1025, 7
        %v1027 = vsub.s32 1, %v1026
        %v1028 = vrot.slane %v680, %v1027
        %1030 = vbcast.lane.b32.xlu0 %v1028, 256
        %v1031 = vpop.permute.xlu0 %1030
        %v1032 = vlaneseq
        %v1033 = vshrl.u32 %v1032, 7
        %v1034 = vsub.s32 2, %v1033
        %v1035 = vrot.slane %v680, %v1034
        %1037 = vbcast.lane.b32.xlu0 %v1035, 256
        %v1038 = vpop.permute.xlu0 %1037
        %v1039 = vlaneseq
        %v1040 = vshrl.u32 %v1039, 7
        %v1041 = vsub.s32 3, %v1040
        %v1042 = vrot.slane %v680, %v1041
        %1044 = vbcast.lane.b32.xlu0 %v1042, 256
        %v1045 = vpop.permute.xlu0 %1044
        %v1046 = vlaneseq
        %v1047 = vshrl.u32 %v1046, 7
        %v1048 = vsub.s32 4, %v1047
        %v1049 = vrot.slane %v680, %v1048
        %1051 = vbcast.lane.b32.xlu0 %v1049, 256
        %v1052 = vpop.permute.xlu0 %1051
        %v1053 = vlaneseq
        %v1054 = vshrl.u32 %v1053, 7
        %v1055 = vsub.s32 5, %v1054
        %v1056 = vrot.slane %v680, %v1055
        %1058 = vbcast.lane.b32.xlu0 %v1056, 256
        %v1059 = vpop.permute.xlu0 %1058
        %v1060 = vlaneseq
        %v1061 = vshrl.u32 %v1060, 7
        %v1062 = vsub.s32 6, %v1061
        %v1063 = vrot.slane %v680, %v1062
        %1065 = vbcast.lane.b32.xlu0 %v1063, 256
        %v1066 = vpop.permute.xlu0 %1065
        %v1067 = vlaneseq
        %v1068 = vshrl.u32 %v1067, 7
        %v1069 = vsub.s32 7, %v1068
        %v1070 = vrot.slane %v680, %v1069
        %1072 = vbcast.lane.b32.xlu0 %v1070, 256
        %v1073 = vpop.permute.xlu0 %1072
        %v1074 = vmul.f32 %v842, %v1024
        %v1075 = vmul.f32 %v843, %v1031
        %v1076 = vmul.f32 %v844, %v1038
        %v1077 = vmul.f32 %v845, %v1045
        %v1078 = vmul.f32 %v846, %v1052
        %v1079 = vmul.f32 %v847, %v1059
        %v1080 = vmul.f32 %v848, %v1066
        %v1081 = vmul.f32 %v849, %v1073
        %v1082 = vrot.slane %v1074, 4
        %v1083 = vadd.f32 %v1074, %v1082
        %v1084 = vrot.slane %v1083, 2
        %v1085 = vadd.f32 %v1083, %v1084
        %v1086 = vrot.slane %v1085, 1
        %v1087 = vadd.f32 %v1085, %v1086
        %v1088 = vrot.slane %v1075, 4
        %v1089 = vadd.f32 %v1075, %v1088
        %v1090 = vrot.slane %v1089, 2
        %v1091 = vadd.f32 %v1089, %v1090
        %v1092 = vrot.slane %v1091, 1
        %v1093 = vadd.f32 %v1091, %v1092
        %v1094 = vrot.slane %v1076, 4
        %v1095 = vadd.f32 %v1076, %v1094
        %v1096 = vrot.slane %v1095, 2
        %v1097 = vadd.f32 %v1095, %v1096
        %v1098 = vrot.slane %v1097, 1
        %v1099 = vadd.f32 %v1097, %v1098
        %v1100 = vrot.slane %v1077, 4
        %v1101 = vadd.f32 %v1077, %v1100
        %v1102 = vrot.slane %v1101, 2
        %v1103 = vadd.f32 %v1101, %v1102
        %v1104 = vrot.slane %v1103, 1
        %v1105 = vadd.f32 %v1103, %v1104
        %v1106 = vrot.slane %v1078, 4
        %v1107 = vadd.f32 %v1078, %v1106
        %v1108 = vrot.slane %v1107, 2
        %v1109 = vadd.f32 %v1107, %v1108
        %v1110 = vrot.slane %v1109, 1
        %v1111 = vadd.f32 %v1109, %v1110
        %v1112 = vrot.slane %v1079, 4
        %v1113 = vadd.f32 %v1079, %v1112
        %v1114 = vrot.slane %v1113, 2
        %v1115 = vadd.f32 %v1113, %v1114
        %v1116 = vrot.slane %v1115, 1
        %v1117 = vadd.f32 %v1115, %v1116
        %v1118 = vrot.slane %v1080, 4
        %v1119 = vadd.f32 %v1080, %v1118
        %v1120 = vrot.slane %v1119, 2
        %v1121 = vadd.f32 %v1119, %v1120
        %v1122 = vrot.slane %v1121, 1
        %v1123 = vadd.f32 %v1121, %v1122
        %v1124 = vrot.slane %v1081, 4
        %v1125 = vadd.f32 %v1081, %v1124
        %v1126 = vrot.slane %v1125, 2
        %v1127 = vadd.f32 %v1125, %v1126
        %v1128 = vrot.slane %v1127, 1
        %v1129 = vadd.f32 %v1127, %v1128
        %v1130 = vlaneseq
        %v1131 = vshrl.u32 %v1130, 7
        %v1132 = vsub.s32 0, %v1131
        %v1133 = vrot.slane %v681, %v1132
        %1135 = vbcast.lane.b32.xlu0 %v1133, 256
        %v1136 = vpop.permute.xlu0 %1135
        %v1137 = vlaneseq
        %v1138 = vshrl.u32 %v1137, 7
        %v1139 = vsub.s32 1, %v1138
        %v1140 = vrot.slane %v681, %v1139
        %1142 = vbcast.lane.b32.xlu0 %v1140, 256
        %v1143 = vpop.permute.xlu0 %1142
        %v1144 = vlaneseq
        %v1145 = vshrl.u32 %v1144, 7
        %v1146 = vsub.s32 2, %v1145
        %v1147 = vrot.slane %v681, %v1146
        %1149 = vbcast.lane.b32.xlu0 %v1147, 256
        %v1150 = vpop.permute.xlu0 %1149
        %v1151 = vlaneseq
        %v1152 = vshrl.u32 %v1151, 7
        %v1153 = vsub.s32 3, %v1152
        %v1154 = vrot.slane %v681, %v1153
        %1156 = vbcast.lane.b32.xlu0 %v1154, 256
        %v1157 = vpop.permute.xlu0 %1156
        %v1158 = vlaneseq
        %v1159 = vshrl.u32 %v1158, 7
        %v1160 = vsub.s32 4, %v1159
        %v1161 = vrot.slane %v681, %v1160
        %1163 = vbcast.lane.b32.xlu0 %v1161, 256
        %v1164 = vpop.permute.xlu0 %1163
        %v1165 = vlaneseq
        %v1166 = vshrl.u32 %v1165, 7
        %v1167 = vsub.s32 5, %v1166
        %v1168 = vrot.slane %v681, %v1167
        %1170 = vbcast.lane.b32.xlu0 %v1168, 256
        %v1171 = vpop.permute.xlu0 %1170
        %v1172 = vlaneseq
        %v1173 = vshrl.u32 %v1172, 7
        %v1174 = vsub.s32 6, %v1173
        %v1175 = vrot.slane %v681, %v1174
        %1177 = vbcast.lane.b32.xlu0 %v1175, 256
        %v1178 = vpop.permute.xlu0 %1177
        %v1179 = vlaneseq
        %v1180 = vshrl.u32 %v1179, 7
        %v1181 = vsub.s32 7, %v1180
        %v1182 = vrot.slane %v681, %v1181
        %1184 = vbcast.lane.b32.xlu0 %v1182, 256
        %v1185 = vpop.permute.xlu0 %1184
        %v1186 = vmul.f32 %v1010, %v1136
        %v1187 = vmul.f32 %v1011, %v1143
        %v1188 = vmul.f32 %v1012, %v1150
        %v1189 = vmul.f32 %v1013, %v1157
        %v1190 = vmul.f32 %v1014, %v1164
        %v1191 = vmul.f32 %v1015, %v1171
        %v1192 = vmul.f32 %v1016, %v1178
        %v1193 = vmul.f32 %v1017, %v1185
        %v1194 = vrot.slane %v1186, 4
        %v1195 = vadd.f32 %v1186, %v1194
        %v1196 = vrot.slane %v1195, 2
        %v1197 = vadd.f32 %v1195, %v1196
        %v1198 = vrot.slane %v1197, 1
        %v1199 = vadd.f32 %v1197, %v1198
        %v1200 = vrot.slane %v1187, 4
        %v1201 = vadd.f32 %v1187, %v1200
        %v1202 = vrot.slane %v1201, 2
        %v1203 = vadd.f32 %v1201, %v1202
        %v1204 = vrot.slane %v1203, 1
        %v1205 = vadd.f32 %v1203, %v1204
        %v1206 = vrot.slane %v1188, 4
        %v1207 = vadd.f32 %v1188, %v1206
        %v1208 = vrot.slane %v1207, 2
        %v1209 = vadd.f32 %v1207, %v1208
        %v1210 = vrot.slane %v1209, 1
        %v1211 = vadd.f32 %v1209, %v1210
        %v1212 = vrot.slane %v1189, 4
        %v1213 = vadd.f32 %v1189, %v1212
        %v1214 = vrot.slane %v1213, 2
        %v1215 = vadd.f32 %v1213, %v1214
        %v1216 = vrot.slane %v1215, 1
        %v1217 = vadd.f32 %v1215, %v1216
        %v1218 = vrot.slane %v1190, 4
        %v1219 = vadd.f32 %v1190, %v1218
        %v1220 = vrot.slane %v1219, 2
        %v1221 = vadd.f32 %v1219, %v1220
        %v1222 = vrot.slane %v1221, 1
        %v1223 = vadd.f32 %v1221, %v1222
        %v1224 = vrot.slane %v1191, 4
        %v1225 = vadd.f32 %v1191, %v1224
        %v1226 = vrot.slane %v1225, 2
        %v1227 = vadd.f32 %v1225, %v1226
        %v1228 = vrot.slane %v1227, 1
        %v1229 = vadd.f32 %v1227, %v1228
        %v1230 = vrot.slane %v1192, 4
        %v1231 = vadd.f32 %v1192, %v1230
        %v1232 = vrot.slane %v1231, 2
        %v1233 = vadd.f32 %v1231, %v1232
        %v1234 = vrot.slane %v1233, 1
        %v1235 = vadd.f32 %v1233, %v1234
        %v1236 = vrot.slane %v1193, 4
        %v1237 = vadd.f32 %v1193, %v1236
        %v1238 = vrot.slane %v1237, 2
        %v1239 = vadd.f32 %v1237, %v1238
        %v1240 = vrot.slane %v1239, 1
        %v1241 = vadd.f32 %v1239, %v1240
        %v1242 = vld [vmem:[#allocation11] sm:$0xff]
        %v1243 = vld [vmem:[#allocation11 + $0x8] sm:$0xff]
        %v1244 = vld [vmem:[#allocation11 + $0x10] sm:$0xff]
        %v1245 = vld [vmem:[#allocation11 + $0x18] sm:$0xff]
        %v1246 = vld [vmem:[#allocation11 + $0x20] sm:$0xff]
        %v1247 = vld [vmem:[#allocation11 + $0x28] sm:$0xff]
        %v1248 = vld [vmem:[#allocation11 + $0x30] sm:$0xff]
        %v1249 = vld [vmem:[#allocation11 + $0x38] sm:$0xff]
        %v1250 = vld [vmem:[#allocation11 + $0x40] sm:$0xff]
        %v1251 = vld [vmem:[#allocation11 + $0x48] sm:$0xff]
        %v1252 = vld [vmem:[#allocation11 + $0x50] sm:$0xff]
        %v1253 = vld [vmem:[#allocation11 + $0x58] sm:$0xff]
        %v1254 = vld [vmem:[#allocation11 + $0x60] sm:$0xff]
        %v1255 = vld [vmem:[#allocation11 + $0x68] sm:$0xff]
        %v1256 = vld [vmem:[#allocation11 + $0x70] sm:$0xff]
        %v1257 = vld [vmem:[#allocation11 + $0x78] sm:$0xff]
        %v1258 = vld [vmem:[#allocation12] sm:$0xff]
        %v1259 = vld [vmem:[#allocation12 + $0x8] sm:$0xff]
        %v1260 = vld [vmem:[#allocation12 + $0x10] sm:$0xff]
        %v1261 = vld [vmem:[#allocation12 + $0x18] sm:$0xff]
        %v1262 = vld [vmem:[#allocation12 + $0x20] sm:$0xff]
        %v1263 = vld [vmem:[#allocation12 + $0x28] sm:$0xff]
        %v1264 = vld [vmem:[#allocation12 + $0x30] sm:$0xff]
        %v1265 = vld [vmem:[#allocation12 + $0x38] sm:$0xff]
        %v1266 = vld [vmem:[#allocation12 + $0x40] sm:$0xff]
        %v1267 = vld [vmem:[#allocation12 + $0x48] sm:$0xff]
        %v1268 = vld [vmem:[#allocation12 + $0x50] sm:$0xff]
        %v1269 = vld [vmem:[#allocation12 + $0x58] sm:$0xff]
        %v1270 = vld [vmem:[#allocation12 + $0x60] sm:$0xff]
        %v1271 = vld [vmem:[#allocation12 + $0x68] sm:$0xff]
        %v1272 = vld [vmem:[#allocation12 + $0x70] sm:$0xff]
        %v1273 = vld [vmem:[#allocation12 + $0x78] sm:$0xff]
        %vm1282 = vcmask 1041409
        %v1283 = vsel %vm1282, %v1205, %v1199
        %vm1284 = vcmask 1042434
        %v1285 = vsel %vm1284, %v1211, %v1283
        %vm1286 = vcmask 1043459
        %v1287 = vsel %vm1286, %v1217, %v1285
        %vm1288 = vcmask 1044484
        %v1289 = vsel %vm1288, %v1223, %v1287
        %vm1290 = vcmask 1045509
        %v1291 = vsel %vm1290, %v1229, %v1289
        %vm1292 = vcmask 1046534
        %v1293 = vsel %vm1292, %v1235, %v1291
        %vm1294 = vcmask 1047559
        %v1295 = vsel %vm1294, %v1241, %v1293
        %1297 = vmatprep.subr.mxu0 0.0
        %1298 = vmatpush1.msra.mxu0 %v1273
        %1299 = vmatprep.subr.mxu0 0.0
        %1300 = vmatpush1.msra.mxu0 %v1272
        %1301 = vmatprep.subr.mxu0 0.0
        %1302 = vmatpush1.msra.mxu0 %v1271
        %1303 = vmatprep.subr.mxu0 0.0
        %1304 = vmatpush1.msra.mxu0 %v1270
        %1305 = vmatprep.subr.mxu0 0.0
        %1306 = vmatpush1.msra.mxu0 %v1269
        %1307 = vmatprep.subr.mxu0 0.0
        %1308 = vmatpush1.msra.mxu0 %v1268
        %1309 = vmatprep.subr.mxu0 0.0
        %1310 = vmatpush1.msra.mxu0 %v1267
        %1311 = vmatprep.subr.mxu0 0.0
        %1312 = vmatpush1.msra.mxu0 %v1266
        %1313 = vmatprep.subr.mxu0 0.0
        %1314 = vmatpush1.msra.mxu0 %v1265
        %1315 = vmatprep.subr.mxu0 0.0
        %1316 = vmatpush1.msra.mxu0 %v1264
        %1317 = vmatprep.subr.mxu0 0.0
        %1318 = vmatpush1.msra.mxu0 %v1263
        %1319 = vmatprep.subr.mxu0 0.0
        %1320 = vmatpush1.msra.mxu0 %v1262
        %1321 = vmatprep.subr.mxu0 0.0
        %1322 = vmatpush1.msra.mxu0 %v1261
        %1323 = vmatprep.subr.mxu0 0.0
        %1324 = vmatpush1.msra.mxu0 %v1260
        %1325 = vmatprep.subr.mxu0 0.0
        %1326 = vmatpush1.msra.mxu0 %v1259
        %1327 = vmatprep.subr.mxu0 0.0
        %1328 = vmatpush1.msra.mxu0 %v1258
        %1329 = vmatprep.subr.mxu0 0.0
        %1330 = vmatpush2.msra.mxu0 0.0
        %1331 = vmatprep.subr.mxu0 0.0
        %1332 = vmatpush2.msra.mxu0 0.0
        %1333 = vmatprep.subr.mxu0 0.0
        %1334 = vmatpush2.msra.mxu0 0.0
        %1335 = vmatprep.subr.mxu0 0.0
        %1336 = vmatpush2.msra.mxu0 0.0
        %1337 = vmatprep.subr.mxu0 0.0
        %1338 = vmatpush2.msra.mxu0 0.0
        %1339 = vmatprep.subr.mxu0 0.0
        %1340 = vmatpush2.msra.mxu0 0.0
        %1341 = vmatprep.subr.mxu0 0.0
        %1342 = vmatpush2.msra.mxu0 0.0
        %1343 = vmatprep.subr.mxu0 0.0
        %1344 = vmatpush2.msra.mxu0 0.0
        %1345 = vmatprep.subr.mxu0 0.0
        %1346 = vmatpush2.msra.mxu0 0.0
        %1347 = vmatprep.subr.mxu0 0.0
        %1348 = vmatpush2.msra.mxu0 0.0
        %1349 = vmatprep.subr.mxu0 0.0
        %1350 = vmatpush2.msra.mxu0 0.0
        %1351 = vmatprep.subr.mxu0 0.0
        %1352 = vmatpush2.msra.mxu0 0.0
        %1353 = vmatprep.subr.mxu0 0.0
        %1354 = vmatpush2.msra.mxu0 0.0
        %1355 = vmatprep.subr.mxu0 0.0
        %1356 = vmatpush2.msra.mxu0 0.0
        %1357 = vmatprep.subr.mxu0 0.0
        %1358 = vmatpush2.msra.mxu0 0.0
        %1359 = vmatprep.subr.mxu0 0.0
        %1360 = vmatpush2.msra.mxu0 0.0
        %1361 = vmatprep.mubr.f32.mxu0 0.0
        %1362 = vmatmul.mubr.f32.gmra.mxu0 %v1295
        %v1363 = vpop.f32.mrf.mxu0
        %v1364 = vadd.f32 0.0, %v1363
        %v1365 = vpop.f32.mrf.mxu0
        %1366 = vdwg.mxu0
        %v1375 = vsel %vm1282, %v1093, %v1087
        %v1376 = vsel %vm1284, %v1099, %v1375
        %v1377 = vsel %vm1286, %v1105, %v1376
        %v1378 = vsel %vm1288, %v1111, %v1377
        %v1379 = vsel %vm1290, %v1117, %v1378
        %v1380 = vsel %vm1292, %v1123, %v1379
        %v1381 = vsel %vm1294, %v1129, %v1380
        %1383 = vmatprep.subr.mxu0 0.0
        %1384 = vmatpush1.msra.mxu0 %v1257
        %1385 = vmatprep.subr.mxu0 0.0
        %1386 = vmatpush1.msra.mxu0 %v1256
        %1387 = vmatprep.subr.mxu0 0.0
        %1388 = vmatpush1.msra.mxu0 %v1255
        %1389 = vmatprep.subr.mxu0 0.0
        %1390 = vmatpush1.msra.mxu0 %v1254
        %1391 = vmatprep.subr.mxu0 0.0
        %1392 = vmatpush1.msra.mxu0 %v1253
        %1393 = vmatprep.subr.mxu0 0.0
        %1394 = vmatpush1.msra.mxu0 %v1252
        %1395 = vmatprep.subr.mxu0 0.0
        %1396 = vmatpush1.msra.mxu0 %v1251
        %1397 = vmatprep.subr.mxu0 0.0
        %1398 = vmatpush1.msra.mxu0 %v1250
        %1399 = vmatprep.subr.mxu0 0.0
        %1400 = vmatpush1.msra.mxu0 %v1249
        %1401 = vmatprep.subr.mxu0 0.0
        %1402 = vmatpush1.msra.mxu0 %v1248
        %1403 = vmatprep.subr.mxu0 0.0
        %1404 = vmatpush1.msra.mxu0 %v1247
        %1405 = vmatprep.subr.mxu0 0.0
        %1406 = vmatpush1.msra.mxu0 %v1246
        %1407 = vmatprep.subr.mxu0 0.0
        %1408 = vmatpush1.msra.mxu0 %v1245
        %1409 = vmatprep.subr.mxu0 0.0
        %1410 = vmatpush1.msra.mxu0 %v1244
        %1411 = vmatprep.subr.mxu0 0.0
        %1412 = vmatpush1.msra.mxu0 %v1243
        %1413 = vmatprep.subr.mxu0 0.0
        %1414 = vmatpush1.msra.mxu0 %v1242
        %1415 = vmatprep.subr.mxu0 0.0
        %1416 = vmatpush2.msra.mxu0 0.0
        %1417 = vmatprep.subr.mxu0 0.0
        %1418 = vmatpush2.msra.mxu0 0.0
        %1419 = vmatprep.subr.mxu0 0.0
        %1420 = vmatpush2.msra.mxu0 0.0
        %1421 = vmatprep.subr.mxu0 0.0
        %1422 = vmatpush2.msra.mxu0 0.0
        %1423 = vmatprep.subr.mxu0 0.0
        %1424 = vmatpush2.msra.mxu0 0.0
        %1425 = vmatprep.subr.mxu0 0.0
        %1426 = vmatpush2.msra.mxu0 0.0
        %1427 = vmatprep.subr.mxu0 0.0
        %1428 = vmatpush2.msra.mxu0 0.0
        %1429 = vmatprep.subr.mxu0 0.0
        %1430 = vmatpush2.msra.mxu0 0.0
        %1431 = vmatprep.subr.mxu0 0.0
        %1432 = vmatpush2.msra.mxu0 0.0
        %1433 = vmatprep.subr.mxu0 0.0
        %1434 = vmatpush2.msra.mxu0 0.0
        %1435 = vmatprep.subr.mxu0 0.0
        %1436 = vmatpush2.msra.mxu0 0.0
        %1437 = vmatprep.subr.mxu0 0.0
        %1438 = vmatpush2.msra.mxu0 0.0
        %1439 = vmatprep.subr.mxu0 0.0
        %1440 = vmatpush2.msra.mxu0 0.0
        %1441 = vmatprep.subr.mxu0 0.0
        %1442 = vmatpush2.msra.mxu0 0.0
        %1443 = vmatprep.subr.mxu0 0.0
        %1444 = vmatpush2.msra.mxu0 0.0
        %1445 = vmatprep.subr.mxu0 0.0
        %1446 = vmatpush2.msra.mxu0 0.0
        %1447 = vmatprep.mubr.f32.mxu0 0.0
        %1448 = vmatmul.mubr.f32.gmra.mxu0 %v1381
        %v1449 = vpop.f32.mrf.mxu0
        %v1450 = vadd.f32 %v1364, %v1449
        %v1451 = vpop.f32.mrf.mxu0
        %1452 = vdwg.mxu0
        %v1453 = vld [vmem:[%s10] sm:$0x1]
        %v1455 = vlaneseq
        %v1456 = vshrl.u32 %v1455, 7
        %v1457 = vsub.s32 0, %v1456
        %v1458 = vrot.slane %v1453, %v1457
        %v1460 = vadd.f32 %v1450, %v1458
        %v1462 = vcombine.high %v1460, %v1460
        %v1464 = vunpack.c.l.s4 1966171168
        %v1465 = vunpack.c.0.s8 %v1464
        %v1466 = vlaneseq
        %v1467 = vshrl.u32 %v1466, 7
        %v1468 = vsub.s32 %v1465, %v1467
        %v1469 = vrot.slane %v1460, %v1468
        %v1471 = vunpack.c.l.s4 1966171168
        %v1472 = vunpack.c.0.s8 %v1471
        %v1473 = vlaneseq
        %v1474 = vshrl.u32 %v1473, 7
        %v1475 = vsub.s32 %v1472, %v1474
        %v1476 = vrot.slane %v1462, %v1475
        %v1477 = vcombine.high %v1469, %v1469
        %v1478 = vcombine.high %v1476, %v1476
        %v1480 = vunpack.c.l.s4 1966171168
        %v1481 = vunpack.c.0.s8 %v1480
        %v1482 = vlaneseq
        %v1483 = vshrl.u32 %v1482, 7
        %v1484 = vsub.s32 %v1481, %v1483
        %v1485 = vrot.slane %v1469, %v1484
        %v1487 = vunpack.c.l.s4 1966171168
        %v1488 = vunpack.c.0.s8 %v1487
        %v1489 = vlaneseq
        %v1490 = vshrl.u32 %v1489, 7
        %v1491 = vsub.s32 %v1488, %v1490
        %v1492 = vrot.slane %v1476, %v1491
        %v1494 = vunpack.c.l.s4 1966171168
        %v1495 = vunpack.c.0.s8 %v1494
        %v1496 = vlaneseq
        %v1497 = vshrl.u32 %v1496, 7
        %v1498 = vsub.s32 %v1495, %v1497
        %v1499 = vrot.slane %v1477, %v1498
        %v1501 = vunpack.c.l.s4 1966171168
        %v1502 = vunpack.c.0.s8 %v1501
        %v1503 = vlaneseq
        %v1504 = vshrl.u32 %v1503, 7
        %v1505 = vsub.s32 %v1502, %v1504
        %v1506 = vrot.slane %v1478, %v1505
        %v1507 = vcombine.high %v1485, %v1485
        %v1508 = vcombine.high %v1492, %v1492
        %v1509 = vcombine.high %v1499, %v1499
        %v1510 = vcombine.high %v1506, %v1506
        %v1511 = vlaneseq
        %v1512 = vshrl.u32 %v1511, 7
        %v1513 = vsub.s32 0, %v1512
        %v1514 = vrot.slane %v1485, %v1513
        %v1515 = vlaneseq
        %v1516 = vshrl.u32 %v1515, 7
        %v1517 = vsub.s32 0, %v1516
        %v1518 = vrot.slane %v1499, %v1517
        %v1519 = vlaneseq
        %v1520 = vshrl.u32 %v1519, 7
        %v1521 = vsub.s32 0, %v1520
        %v1522 = vrot.slane %v1507, %v1521
        %v1523 = vlaneseq
        %v1524 = vshrl.u32 %v1523, 7
        %v1525 = vsub.s32 0, %v1524
        %v1526 = vrot.slane %v1509, %v1525
        %v1527 = vlaneseq
        %v1528 = vshrl.u32 %v1527, 7
        %v1529 = vsub.s32 0, %v1528
        %v1530 = vrot.slane %v1492, %v1529
        %v1531 = vlaneseq
        %v1532 = vshrl.u32 %v1531, 7
        %v1533 = vsub.s32 0, %v1532
        %v1534 = vrot.slane %v1506, %v1533
        %v1535 = vlaneseq
        %v1536 = vshrl.u32 %v1535, 7
        %v1537 = vsub.s32 0, %v1536
        %v1538 = vrot.slane %v1508, %v1537
        %v1539 = vlaneseq
        %v1540 = vshrl.u32 %v1539, 7
        %v1541 = vsub.s32 0, %v1540
        %v1542 = vrot.slane %v1510, %v1541
        %v1551 = vmul.f32 %v842, %v1514
        %v1552 = vmul.f32 %v843, %v1518
        %v1553 = vmul.f32 %v844, %v1522
        %v1554 = vmul.f32 %v845, %v1526
        %v1555 = vmul.f32 %v846, %v1530
        %v1556 = vmul.f32 %v847, %v1534
        %v1557 = vmul.f32 %v848, %v1538
        %v1558 = vmul.f32 %v849, %v1542
        %1559 = vadd.xlane.f32.xlu0 %v1551
        %v1560 = vpop.xlane.xlu0 %1559
        %1561 = vadd.xlane.f32.xlu0 %v1552
        %v1562 = vpop.xlane.xlu0 %1561
        %1563 = vadd.xlane.f32.xlu0 %v1553
        %v1564 = vpop.xlane.xlu0 %1563
        %1565 = vadd.xlane.f32.xlu0 %v1554
        %v1566 = vpop.xlane.xlu0 %1565
        %1567 = vadd.xlane.f32.xlu0 %v1555
        %v1568 = vpop.xlane.xlu0 %1567
        %1569 = vadd.xlane.f32.xlu0 %v1556
        %v1570 = vpop.xlane.xlu0 %1569
        %1571 = vadd.xlane.f32.xlu0 %v1557
        %v1572 = vpop.xlane.xlu0 %1571
        %1573 = vadd.xlane.f32.xlu0 %v1558
        %v1574 = vpop.xlane.xlu0 %1573
        %v1583 = vlaneseq
        %v1584 = vand.u32 %v1583, 127
        %v1585 = vlaneseq
        %v1586 = vshrl.u32 %v1585, 7
        %v1587 = vsub.s32 %v1584, %v1586
        %v1588 = vrot.slane %v1560, %v1587
        %v1589 = vlaneseq
        %v1590 = vshrl.u32 %v1589, 7
        %v1591 = vsub.s32 %v1584, %v1590
        %v1592 = vrot.slane %v1562, %v1591
        %v1593 = vlaneseq
        %v1594 = vshrl.u32 %v1593, 7
        %v1595 = vsub.s32 %v1584, %v1594
        %v1596 = vrot.slane %v1564, %v1595
        %v1597 = vlaneseq
        %v1598 = vshrl.u32 %v1597, 7
        %v1599 = vsub.s32 %v1584, %v1598
        %v1600 = vrot.slane %v1566, %v1599
        %v1601 = vlaneseq
        %v1602 = vshrl.u32 %v1601, 7
        %v1603 = vsub.s32 %v1584, %v1602
        %v1604 = vrot.slane %v1568, %v1603
        %v1605 = vlaneseq
        %v1606 = vshrl.u32 %v1605, 7
        %v1607 = vsub.s32 %v1584, %v1606
        %v1608 = vrot.slane %v1570, %v1607
        %v1609 = vlaneseq
        %v1610 = vshrl.u32 %v1609, 7
        %v1611 = vsub.s32 %v1584, %v1610
        %v1612 = vrot.slane %v1572, %v1611
        %v1613 = vlaneseq
        %v1614 = vshrl.u32 %v1613, 7
        %v1615 = vsub.s32 %v1584, %v1614
        %v1616 = vrot.slane %v1574, %v1615
        %v1617 = vsel %vm1282, %v1592, %v1588
        %v1618 = vsel %vm1284, %v1596, %v1617
        %v1619 = vsel %vm1286, %v1600, %v1618
        %v1620 = vsel %vm1288, %v1604, %v1619
        %v1621 = vsel %vm1290, %v1608, %v1620
        %v1622 = vsel %vm1292, %v1612, %v1621
        %v1623 = vsel %vm1294, %v1616, %v1622
        %vm1625 = vcmask 64512
        %v1626 = vsel %vm1625, %v1623, -inf
        %1627 = vmax.xlane.f32.xlu0 %v1626
        %v1628 = vpop.xlane.xlu0 %1627
        %v1630 = vlaneseq
        %v1631 = vshrl.u32 %v1630, 7
        %v1632 = vsub.s32 0, %v1631
        %v1633 = vrot.slane %v1628, %v1632
        %v1634 = vlaneseq
        %v1635 = vshrl.u32 %v1634, 7
        %v1636 = vsub.s32 1, %v1635
        %v1637 = vrot.slane %v1628, %v1636
        %v1638 = vlaneseq
        %v1639 = vshrl.u32 %v1638, 7
        %v1640 = vsub.s32 2, %v1639
        %v1641 = vrot.slane %v1628, %v1640
        %v1642 = vlaneseq
        %v1643 = vshrl.u32 %v1642, 7
        %v1644 = vsub.s32 3, %v1643
        %v1645 = vrot.slane %v1628, %v1644
        %v1646 = vlaneseq
        %v1647 = vshrl.u32 %v1646, 7
        %v1648 = vsub.s32 4, %v1647
        %v1649 = vrot.slane %v1628, %v1648
        %v1650 = vlaneseq
        %v1651 = vshrl.u32 %v1650, 7
        %v1652 = vsub.s32 5, %v1651
        %v1653 = vrot.slane %v1628, %v1652
        %v1654 = vlaneseq
        %v1655 = vshrl.u32 %v1654, 7
        %v1656 = vsub.s32 6, %v1655
        %v1657 = vrot.slane %v1628, %v1656
        %v1658 = vlaneseq
        %v1659 = vshrl.u32 %v1658, 7
        %v1660 = vsub.s32 7, %v1659
        %v1661 = vrot.slane %v1628, %v1660
        %v1670 = vsub.f32 %v1560, %v1633
        %v1671 = vsub.f32 %v1562, %v1637
        %v1672 = vsub.f32 %v1564, %v1641
        %v1673 = vsub.f32 %v1566, %v1645
        %v1674 = vsub.f32 %v1568, %v1649
        %v1675 = vsub.f32 %v1570, %v1653
        %v1676 = vsub.f32 %v1572, %v1657
        %v1677 = vsub.f32 %v1574, %v1661
        %v1678 = vmul.f32 %v1670, 1.442695
        %v1679 = vpow.pop %v1678
        %v1680 = vmul.f32 %v1671, 1.442695
        %v1681 = vpow.pop %v1680
        %v1682 = vmul.f32 %v1672, 1.442695
        %v1683 = vpow.pop %v1682
        %v1684 = vmul.f32 %v1673, 1.442695
        %v1685 = vpow.pop %v1684
        %v1686 = vmul.f32 %v1674, 1.442695
        %v1687 = vpow.pop %v1686
        %v1688 = vmul.f32 %v1675, 1.442695
        %v1689 = vpow.pop %v1688
        %v1690 = vmul.f32 %v1676, 1.442695
        %v1691 = vpow.pop %v1690
        %v1692 = vmul.f32 %v1677, 1.442695
        %v1693 = vpow.pop %v1692
        %1702 = vset.pattern.permute.xlu0 0
        %1703 = vperm.xlu0 %1702, %v1679
        %v1704 = vpop.permute.xlu0 %1703
        %1705 = vset.pattern.permute.xlu0 0
        %1706 = vperm.xlu0 %1705, %v1681
        %v1707 = vpop.permute.xlu0 %1706
        %1708 = vset.pattern.permute.xlu0 0
        %1709 = vperm.xlu0 %1708, %v1683
        %v1710 = vpop.permute.xlu0 %1709
        %1711 = vset.pattern.permute.xlu0 0
        %1712 = vperm.xlu0 %1711, %v1685
        %v1713 = vpop.permute.xlu0 %1712
        %1714 = vset.pattern.permute.xlu0 0
        %1715 = vperm.xlu0 %1714, %v1687
        %v1716 = vpop.permute.xlu0 %1715
        %1717 = vset.pattern.permute.xlu0 0
        %1718 = vperm.xlu0 %1717, %v1689
        %v1719 = vpop.permute.xlu0 %1718
        %1720 = vset.pattern.permute.xlu0 0
        %1721 = vperm.xlu0 %1720, %v1691
        %v1722 = vpop.permute.xlu0 %1721
        %1723 = vset.pattern.permute.xlu0 0
        %1724 = vperm.xlu0 %1723, %v1693
        %v1725 = vpop.permute.xlu0 %1724
        %v1726 = vlaneseq
        %v1727 = vshrl.u32 %v1726, 7
        %v1728 = vsub.s32 %v1584, %v1727
        %v1729 = vrot.slane %v1704, %v1728
        %v1730 = vlaneseq
        %v1731 = vshrl.u32 %v1730, 7
        %v1732 = vsub.s32 %v1584, %v1731
        %v1733 = vrot.slane %v1707, %v1732
        %v1734 = vlaneseq
        %v1735 = vshrl.u32 %v1734, 7
        %v1736 = vsub.s32 %v1584, %v1735
        %v1737 = vrot.slane %v1710, %v1736
        %v1738 = vlaneseq
        %v1739 = vshrl.u32 %v1738, 7
        %v1740 = vsub.s32 %v1584, %v1739
        %v1741 = vrot.slane %v1713, %v1740
        %v1742 = vlaneseq
        %v1743 = vshrl.u32 %v1742, 7
        %v1744 = vsub.s32 %v1584, %v1743
        %v1745 = vrot.slane %v1716, %v1744
        %v1746 = vlaneseq
        %v1747 = vshrl.u32 %v1746, 7
        %v1748 = vsub.s32 %v1584, %v1747
        %v1749 = vrot.slane %v1719, %v1748
        %v1750 = vlaneseq
        %v1751 = vshrl.u32 %v1750, 7
        %v1752 = vsub.s32 %v1584, %v1751
        %v1753 = vrot.slane %v1722, %v1752
        %v1754 = vlaneseq
        %v1755 = vshrl.u32 %v1754, 7
        %v1756 = vsub.s32 %v1584, %v1755
        %v1757 = vrot.slane %v1725, %v1756
        %v1758 = vsel %vm1282, %v1733, %v1729
        %v1759 = vsel %vm1284, %v1737, %v1758
        %v1760 = vsel %vm1286, %v1741, %v1759
        %v1761 = vsel %vm1288, %v1745, %v1760
        %v1762 = vsel %vm1290, %v1749, %v1761
        %v1763 = vsel %vm1292, %v1753, %v1762
        %v1764 = vsel %vm1294, %v1757, %v1763
        %v1766 = vsel %vm1625, %v1764, 0.0
        %1767 = vadd.xlane.f32.xlu0 %v1766
        %v1768 = vpop.xlane.xlu0 %1767
        %v1769 = vrcp.pop %v1768
        %v1771 = vlaneseq
        %v1772 = vshrl.u32 %v1771, 7
        %v1773 = vsub.s32 0, %v1772
        %v1774 = vrot.slane %v1769, %v1773
        %v1775 = vlaneseq
        %v1776 = vshrl.u32 %v1775, 7
        %v1777 = vsub.s32 1, %v1776
        %v1778 = vrot.slane %v1769, %v1777
        %v1779 = vlaneseq
        %v1780 = vshrl.u32 %v1779, 7
        %v1781 = vsub.s32 2, %v1780
        %v1782 = vrot.slane %v1769, %v1781
        %v1783 = vlaneseq
        %v1784 = vshrl.u32 %v1783, 7
        %v1785 = vsub.s32 3, %v1784
        %v1786 = vrot.slane %v1769, %v1785
        %v1787 = vlaneseq
        %v1788 = vshrl.u32 %v1787, 7
        %v1789 = vsub.s32 4, %v1788
        %v1790 = vrot.slane %v1769, %v1789
        %v1791 = vlaneseq
        %v1792 = vshrl.u32 %v1791, 7
        %v1793 = vsub.s32 5, %v1792
        %v1794 = vrot.slane %v1769, %v1793
        %v1795 = vlaneseq
        %v1796 = vshrl.u32 %v1795, 7
        %v1797 = vsub.s32 6, %v1796
        %v1798 = vrot.slane %v1769, %v1797
        %v1799 = vlaneseq
        %v1800 = vshrl.u32 %v1799, 7
        %v1801 = vsub.s32 7, %v1800
        %v1802 = vrot.slane %v1769, %v1801
        %v1811 = vmul.f32 %v1679, %v1774
        %v1812 = vmul.f32 %v1681, %v1778
        %v1813 = vmul.f32 %v1683, %v1782
        %v1814 = vmul.f32 %v1685, %v1786
        %v1815 = vmul.f32 %v1687, %v1790
        %v1816 = vmul.f32 %v1689, %v1794
        %v1817 = vmul.f32 %v1691, %v1798
        %v1818 = vmul.f32 %v1693, %v1802
        %1820 = vset.pattern.permute.xlu0 0
        %1821 = vperm.xlu0 %1820, %v1811
        %v1822 = vpop.permute.xlu0 %1821
        %1825 = vset.pattern.permute.xlu0 0
        %1826 = vperm.xlu0 %1825, %v1812
        %v1827 = vpop.permute.xlu0 %1826
        %1830 = vset.pattern.permute.xlu0 0
        %1831 = vperm.xlu0 %1830, %v1813
        %v1832 = vpop.permute.xlu0 %1831
        %1835 = vset.pattern.permute.xlu0 0
        %1836 = vperm.xlu0 %1835, %v1814
        %v1837 = vpop.permute.xlu0 %1836
        %1840 = vset.pattern.permute.xlu0 0
        %1841 = vperm.xlu0 %1840, %v1815
        %v1842 = vpop.permute.xlu0 %1841
        %1845 = vset.pattern.permute.xlu0 0
        %1846 = vperm.xlu0 %1845, %v1816
        %v1847 = vpop.permute.xlu0 %1846
        %1850 = vset.pattern.permute.xlu0 0
        %1851 = vperm.xlu0 %1850, %v1817
        %v1852 = vpop.permute.xlu0 %1851
        %1855 = vset.pattern.permute.xlu0 0
        %1856 = vperm.xlu0 %1855, %v1818
        %v1857 = vpop.permute.xlu0 %1856
        %v1859 = vmul.f32 %v842, %v1822
        %v1860 = vmul.f32 %v843, %v1827
        %v1861 = vmul.f32 %v844, %v1832
        %v1862 = vmul.f32 %v845, %v1837
        %v1863 = vmul.f32 %v846, %v1842
        %v1864 = vmul.f32 %v847, %v1847
        %v1865 = vmul.f32 %v848, %v1852
        %v1866 = vmul.f32 %v849, %v1857
        %v1867 = vrot.slane %v1859, 4
        %v1868 = vadd.f32 %v1859, %v1867
        %v1869 = vrot.slane %v1868, 2
        %v1870 = vadd.f32 %v1868, %v1869
        %v1871 = vrot.slane %v1870, 1
        %v1872 = vadd.f32 %v1870, %v1871
        %v1873 = vrot.slane %v1860, 4
        %v1874 = vadd.f32 %v1860, %v1873
        %v1875 = vrot.slane %v1874, 2
        %v1876 = vadd.f32 %v1874, %v1875
        %v1877 = vrot.slane %v1876, 1
        %v1878 = vadd.f32 %v1876, %v1877
        %v1879 = vrot.slane %v1861, 4
        %v1880 = vadd.f32 %v1861, %v1879
        %v1881 = vrot.slane %v1880, 2
        %v1882 = vadd.f32 %v1880, %v1881
        %v1883 = vrot.slane %v1882, 1
        %v1884 = vadd.f32 %v1882, %v1883
        %v1885 = vrot.slane %v1862, 4
        %v1886 = vadd.f32 %v1862, %v1885
        %v1887 = vrot.slane %v1886, 2
        %v1888 = vadd.f32 %v1886, %v1887
        %v1889 = vrot.slane %v1888, 1
        %v1890 = vadd.f32 %v1888, %v1889
        %v1891 = vrot.slane %v1863, 4
        %v1892 = vadd.f32 %v1863, %v1891
        %v1893 = vrot.slane %v1892, 2
        %v1894 = vadd.f32 %v1892, %v1893
        %v1895 = vrot.slane %v1894, 1
        %v1896 = vadd.f32 %v1894, %v1895
        %v1897 = vrot.slane %v1864, 4
        %v1898 = vadd.f32 %v1864, %v1897
        %v1899 = vrot.slane %v1898, 2
        %v1900 = vadd.f32 %v1898, %v1899
        %v1901 = vrot.slane %v1900, 1
        %v1902 = vadd.f32 %v1900, %v1901
        %v1903 = vrot.slane %v1865, 4
        %v1904 = vadd.f32 %v1865, %v1903
        %v1905 = vrot.slane %v1904, 2
        %v1906 = vadd.f32 %v1904, %v1905
        %v1907 = vrot.slane %v1906, 1
        %v1908 = vadd.f32 %v1906, %v1907
        %v1909 = vrot.slane %v1866, 4
        %v1910 = vadd.f32 %v1866, %v1909
        %v1911 = vrot.slane %v1910, 2
        %v1912 = vadd.f32 %v1910, %v1911
        %v1913 = vrot.slane %v1912, 1
        %v1914 = vadd.f32 %v1912, %v1913
        %v1915 = vld [vmem:[#allocation14] sm:$0xff]
        %v1916 = vld [vmem:[#allocation14 + $0x8] sm:$0xff]
        %v1917 = vld [vmem:[#allocation14 + $0x10] sm:$0xff]
        %v1918 = vld [vmem:[#allocation14 + $0x18] sm:$0xff]
        %v1919 = vld [vmem:[#allocation14 + $0x20] sm:$0xff]
        %v1920 = vld [vmem:[#allocation14 + $0x28] sm:$0xff]
        %v1921 = vld [vmem:[#allocation14 + $0x30] sm:$0xff]
        %v1922 = vld [vmem:[#allocation14 + $0x38] sm:$0xff]
        %v1923 = vld [vmem:[#allocation14 + $0x40] sm:$0xff]
        %v1924 = vld [vmem:[#allocation14 + $0x48] sm:$0xff]
        %v1925 = vld [vmem:[#allocation14 + $0x50] sm:$0xff]
        %v1926 = vld [vmem:[#allocation14 + $0x58] sm:$0xff]
        %v1927 = vld [vmem:[#allocation14 + $0x60] sm:$0xff]
        %v1928 = vld [vmem:[#allocation14 + $0x68] sm:$0xff]
        %v1929 = vld [vmem:[#allocation14 + $0x70] sm:$0xff]
        %v1930 = vld [vmem:[#allocation14 + $0x78] sm:$0xff]
        %v1931 = vld [vmem:[%s12] sm:$0x1]
        %v1933 = vlaneseq
        %v1934 = vshrl.u32 %v1933, 7
        %v1935 = vsub.s32 0, %v1934
        %v1936 = vrot.slane %v1931, %v1935
        %v1946 = vsel %vm1282, %v1878, %v1872
        %v1947 = vsel %vm1284, %v1884, %v1946
        %v1948 = vsel %vm1286, %v1890, %v1947
        %v1949 = vsel %vm1288, %v1896, %v1948
        %v1950 = vsel %vm1290, %v1902, %v1949
        %v1951 = vsel %vm1292, %v1908, %v1950
        %v1952 = vsel %vm1294, %v1914, %v1951
        %1954 = vmatprep.subr.mxu0 0.0
        %1955 = vmatpush1.msra.mxu0 %v1930
        %1956 = vmatprep.subr.mxu0 0.0
        %1957 = vmatpush1.msra.mxu0 %v1929
        %1958 = vmatprep.subr.mxu0 0.0
        %1959 = vmatpush1.msra.mxu0 %v1928
        %1960 = vmatprep.subr.mxu0 0.0
        %1961 = vmatpush1.msra.mxu0 %v1927
        %1962 = vmatprep.subr.mxu0 0.0
        %1963 = vmatpush1.msra.mxu0 %v1926
        %1964 = vmatprep.subr.mxu0 0.0
        %1965 = vmatpush1.msra.mxu0 %v1925
        %1966 = vmatprep.subr.mxu0 0.0
        %1967 = vmatpush1.msra.mxu0 %v1924
        %1968 = vmatprep.subr.mxu0 0.0
        %1969 = vmatpush1.msra.mxu0 %v1923
        %1970 = vmatprep.subr.mxu0 0.0
        %1971 = vmatpush1.msra.mxu0 %v1922
        %1972 = vmatprep.subr.mxu0 0.0
        %1973 = vmatpush1.msra.mxu0 %v1921
        %1974 = vmatprep.subr.mxu0 0.0
        %1975 = vmatpush1.msra.mxu0 %v1920
        %1976 = vmatprep.subr.mxu0 0.0
        %1977 = vmatpush1.msra.mxu0 %v1919
        %1978 = vmatprep.subr.mxu0 0.0
        %1979 = vmatpush1.msra.mxu0 %v1918
        %1980 = vmatprep.subr.mxu0 0.0
        %1981 = vmatpush1.msra.mxu0 %v1917
        %1982 = vmatprep.subr.mxu0 0.0
        %1983 = vmatpush1.msra.mxu0 %v1916
        %1984 = vmatprep.subr.mxu0 0.0
        %1985 = vmatpush1.msra.mxu0 %v1915
        %1986 = vmatprep.subr.mxu0 0.0
        %1987 = vmatpush2.msra.mxu0 0.0
        %1988 = vmatprep.subr.mxu0 0.0
        %1989 = vmatpush2.msra.mxu0 0.0
        %1990 = vmatprep.subr.mxu0 0.0
        %1991 = vmatpush2.msra.mxu0 0.0
        %1992 = vmatprep.subr.mxu0 0.0
        %1993 = vmatpush2.msra.mxu0 0.0
        %1994 = vmatprep.subr.mxu0 0.0
        %1995 = vmatpush2.msra.mxu0 0.0
        %1996 = vmatprep.subr.mxu0 0.0
        %1997 = vmatpush2.msra.mxu0 0.0
        %1998 = vmatprep.subr.mxu0 0.0
        %1999 = vmatpush2.msra.mxu0 0.0
        %2000 = vmatprep.subr.mxu0 0.0
        %2001 = vmatpush2.msra.mxu0 0.0
        %2002 = vmatprep.subr.mxu0 0.0
        %2003 = vmatpush2.msra.mxu0 0.0
        %2004 = vmatprep.subr.mxu0 0.0
        %2005 = vmatpush2.msra.mxu0 0.0
        %2006 = vmatprep.subr.mxu0 0.0
        %2007 = vmatpush2.msra.mxu0 0.0
        %2008 = vmatprep.subr.mxu0 0.0
        %2009 = vmatpush2.msra.mxu0 0.0
        %2010 = vmatprep.subr.mxu0 0.0
        %2011 = vmatpush2.msra.mxu0 0.0
        %2012 = vmatprep.subr.mxu0 0.0
        %2013 = vmatpush2.msra.mxu0 0.0
        %2014 = vmatprep.subr.mxu0 0.0
        %2015 = vmatpush2.msra.mxu0 0.0
        %2016 = vmatprep.subr.mxu0 0.0
        %2017 = vmatpush2.msra.mxu0 0.0
        %2018 = vmatprep.mubr.f32.mxu0 0.0
        %2019 = vmatmul.mubr.f32.gmra.mxu0 %v1952
        %v2020 = vpop.f32.mrf.mxu0
        %v2021 = vadd.f32 %v1936, %v2020
        %v2022 = vpop.f32.mrf.mxu0
        %2023 = vdwg.mxu0
        %v2024 = vtanh.pop %v2021
        %v2025 = vadd.f32 %v1460, %v2024
        %v2026 = vld [vmem:[%s13] sm:$0x1]
        %v2028 = vlaneseq
        %v2029 = vshrl.u32 %v2028, 7
        %v2030 = vsub.s32 0, %v2029
        %v2031 = vrot.slane %v2026, %v2030
        %v2033 = vmul.f32 %v2025, %v2031
        %2034 = vadd.xlane.f32.xlu0 %v2033
        %v2035 = vpop.xlane.xlu0 %2034
        %v2036 = vld [vmem:[#allocation2] sm:$0x1]
        %v2038 = vlaneseq
        %v2039 = vshrl.u32 %v2038, 7
        %v2040 = vsub.s32 0, %v2039
        %v2041 = vrot.slane %v2036, %v2040
        %v2043 = vadd.f32 %v2035, %v2041
        %2045 = vset.pattern.permute.xlu0 0
        %2046 = vperm.xlu0 %2045, %v2043
        %v2047 = vpop.permute.xlu0 %2046
        %2049 = vst [vmem:[%s652] sm:$0xff] %v2047
        %s2050 = sand.u32 %s382, 1
        %s2051 = scalar_lea.sflag [#allocation5], %s2050
        %s2052 = sand.u32 %s382, 1
        %s2053 = smul.addr %s2052, 8
        %s2054 = scalar_lea.vmem [#allocation15], %s2053
        // Predicated region
        $region109: #{tpu_custom_call.1} parent=79 // pred_check
          %p2055 = pneg %p392
        $region110: #{tpu_custom_call.1} parent=79 // pred_check_branch
          %2057 = sbr.rel (%p2055) target = $region112
        $region111: #{tpu_custom_call.1} parent=79 // pred_region
          %s2059 = ssub.s32 128, 128
          %2060 = vsyncadd %s2051, %s2059
          %s2061 = smul.addr %s39, 128
          %s2062 = scalar_lea.hbm %s15, %s2061
          %s2064 = sshll.u32 %s2054, 4
          %s2065 = int_to_ptr.vmem [resolvable:$true] %s2064
          %2067 = dma.vmem_to_hbm [thread:$0]  %s2065, 128, %s2062, %s2051
        $region112: #{tpu_custom_call.1} parent=79 // pred_fallthru
          _
      $region80: #{tpu_custom_call.1} parent=5 // pred_fallthru
        _
      %p2068 = scmp.le.s32.totalorder 2, %s34
      // Predicated region
      $region113: #{tpu_custom_call.1} parent=5 // pred_check
        %p2069 = pneg %p2068
      $region114: #{tpu_custom_call.1} parent=5 // pred_check_branch
        %2071 = sbr.rel (%p2069) target = $region116
      $region115: #{tpu_custom_call.1} parent=5 // pred_region
        %s2072 = ssub.s32 %s34, 2
        // Predicated region
        $region117: #{tpu_custom_call.1} parent=115 // pred_check
          %p2073 = pneg %p398
        $region118: #{tpu_custom_call.1} parent=115 // pred_check_branch
          %2075 = sbr.rel (%p2073) target = $region120
        $region119: #{tpu_custom_call.1} parent=115 // pred_region
          %s2076 = sand.u32 %s383, 1
          %s2077 = scalar_lea.sflag [#allocation5], %s2076
          %s2078 = sand.u32 %s383, 1
          %s2079 = smul.addr %s2078, 8
          %s2080 = scalar_lea.vmem [#allocation15], %s2079
          %2081 = dma.done %s2077, 128
        $region120: #{tpu_custom_call.1} parent=115 // pred_fallthru
          _
      $region116: #{tpu_custom_call.1} parent=5 // pred_fallthru
        _
    $region6: #{tpu_custom_call.1} parent=1 // loop_footer
      %s38 = sadd.s32 1, %s34
    $region7: #{tpu_custom_call.1} parent=1 // loop_footer_branch
      %33 = sbr.rel target = $region3
    $region8: #{tpu_custom_call.1} parent=1 // loop_exit
      _
    %2082 = vsyncpa [#allocation4], 1
    %s2083 = scalar_lea.sflag [#allocation4], 1
    %2084 = vsyncpa %s2083, 1
    %2085 = vsyncpa [#allocation7], 1
    %s2086 = scalar_lea.sflag [#allocation7], 1
    %2087 = vsyncpa %s2086, 1
    %2088 = vsyncpa [#allocation10], 1
    %2089 = vsyncpa [#allocation13], 1
    %2090 = vsyncpa [#allocation5], 1
    %s2091 = scalar_lea.sflag [#allocation5], 1
    %2092 = vsyncpa %s2091, 1

</llo_original>
